<compile_context>
chip_gen: v6e
topology: v6e:2x2x1
jax: 0.10.0
libtpu: 0.0.40
codegen_flags: <defaults>
</compile_context>

<pallas_src>
import functools

import jax
import jax.numpy as jnp
from jax.experimental import pallas as pl
from jax.experimental.pallas import tpu as pltpu

_LANE = 128
_ACT_VMEM_BUDGET = 8 * 1024 * 1024  # working-set budget for (H, TB) activations + I/O tiles


def _fcn_kernel(x_ref, w1_ref, b1_ref, wh_ref, bh_ref, we_ref, be_ref, o_ref,
                *, n_hid_layers, n_in, matmul_dtype):
    x = x_ref[...]                       # (n_in, TB)   batch on lane axis
    w1 = w1_ref[...]                     # (H, n_in)    torch layout (out, in)
    b1 = b1_ref[...]                     # (H, 1)
    if n_in == 1:
        # Outer product: VPU broadcast FMA; no MXU push for a K=1 matmul.
        pre = w1.astype(jnp.float32) * x + b1          # (H,1)*(1,TB)+(H,1) -> (H,TB)
    else:
        pre = jnp.dot(w1, x.astype(matmul_dtype),
                      preferred_element_type=jnp.float32) + b1
    h = jnp.tanh(pre)                    # f32, (H, TB), lane-dense

    for l in range(n_hid_layers):        # static unroll over hidden layers
        # Weights already stored in matmul_dtype (hoisted cast in the wrapper);
        # only the activation is cast per layer.
        z = jnp.dot(wh_ref[l], h.astype(matmul_dtype),
                    preferred_element_type=jnp.float32) + bh_ref[l]
        h = jnp.tanh(z)

    out = jnp.dot(we_ref[...], h.astype(matmul_dtype),
                  preferred_element_type=jnp.float32) + be_ref[...]
    o_ref[...] = out.astype(o_ref.dtype)  # (n_out, TB) lane-dense store


def _device_profile():
    """Best-effort (num_tensorcores_per_chip, vmem_capacity_bytes)."""
    num_cores, vmem_bytes = 1, 128 * 1024 * 1024
    try:
        kind = jax.devices()[0].device_kind.lower()
    except Exception:
        kind = ""
    if "v7" in kind:
        num_cores, vmem_bytes = 2, 64 * 1024 * 1024
    try:
        info = pltpu.get_tpu_info()
        vmem_bytes = int(getattr(info, "vmem_capacity_bytes", vmem_bytes))
    except Exception:
        pass
    return num_cores, vmem_bytes


def _choose_tile_batch(n, n_hidden, n_in, n_out, num_cores):
    """Lane-multiple batch tile sized against a VMEM working-set budget.

    1-TC chips (v5e/v6e): one grid step whenever the data fits the budget
    (no per-step overhead for a few-microsecond kernel).  2-TC chips (v7x):
    aim for a grid that is a multiple of the core count so CORE_PARALLEL
    keeps both TensorCores busy.
    """
    n_lanes = pl.cdiv(n, _LANE) * _LANE
    # ~4 live (H, TB) f32 activation copies + double-buffered x/out tiles per lane.
    per_lane_bytes = 4 * (4 * max(n_hidden, 1) + 2 * (n_in + n_out))
    cap = max(_LANE, (_ACT_VMEM_BUDGET // per_lane_bytes) // _LANE * _LANE)
    t = min(cap, n_lanes)
    if num_cores >= 2 and n_lanes >= num_cores * _LANE:
        per_core = max(_LANE, (n_lanes // num_cores) // _LANE * _LANE)
        t = min(t, per_core)
    return t


def _const_spec(shape, single_buffer):
    """Full-array BlockSpec with a constant (grid-invariant) index_map."""
    index_map = lambda i, _nd=len(shape): (0,) * _nd
    if single_buffer:
        try:
            # Invariant blocks don't need double buffering.
            return pl.BlockSpec(shape, index_map, pipeline_mode=pl.Buffered(1))
        except TypeError:  # Pallas build without pipeline_mode kwarg
            pass
    return pl.BlockSpec(shape, index_map)


def fcn_forward(x, params, *, tile_batch=None, matmul_dtype=jnp.float32,
                single_buffer_weights=True, core_parallel=None):
    """FCN forward pass on TPU via a single Pallas kernel.

    x: (N, n_input) float32; N need not be a tile multiple (zero-padded).
    params (torch weight layout, (out_features, in_features)):
        w1 (H, n_in), b1 (H, 1), wh (L-1, H, H), bh (L-1, H, 1),
        we (n_out, H), be (n_out, 1).
    Returns (N, n_out) float32.

    matmul_dtype: bfloat16 helps on ALL generations once H is large (the MXUs
    are natively bf16; f32 matmuls take multiple passes) -- keep f32 only for
    tiny H (<=64) or when 1e-5-level agreement with an f32 reference matters.
    When bf16 is requested, the weights are cast once here (not per grid step
    inside the kernel); biases and accumulation stay f32.
    """
    w1, b1, wh, bh, we, be = (params["w1"], params["b1"], params["wh"],
                              params["bh"], params["we"], params["be"])
    n, n_in = x.shape
    n_hidden = w1.shape[0]
    n_out = we.shape[0]
    n_hid_layers = wh.shape[0]

    # Hoist the matmul-dtype cast out of the kernel (per-layer pack ops,
    # weight DMA bytes and weight VMEM all halve for bf16).
    if matmul_dtype != w1.dtype:
        wh = wh.astype(matmul_dtype)
        we = we.astype(matmul_dtype)
        if n_in > 1:                      # n_in == 1 uses the f32 VPU FMA path
            w1 = w1.astype(matmul_dtype)

    # Zero hidden layers (n_layers == 1): pass a non-empty dummy stack so no
    # BlockSpec has a zero-sized dimension; the kernel never reads it.
    if n_hid_layers == 0:
        wh = jnp.zeros((1, n_hidden, n_hidden), wh.dtype)
        bh = jnp.zeros((1, n_hidden, 1), bh.dtype)

    num_cores, vmem_cap = _device_profile()
    if tile_batch is None:
        tile_batch = _choose_tile_batch(n, n_hidden, n_in, n_out, num_cores)

    grid_n = pl.cdiv(n, tile_batch)
    n_pad = grid_n * tile_batch

    # (features, batch) layout: batch rides the lane axis; pad batch with zeros
    # (padded rows are computed and discarded on the way out).  At n_in=n_out=1
    # this pad/transpose round-trip is ~2 KiB and negligible.
    # TODO(synk): for wide n_in/n_out, fold the ragged tail into the kernel
    # (masked store) instead of a wrapper-side materialized pad.
    xt = jnp.zeros((n_in, n_pad), x.dtype).at[:, :n].set(x.T)

    kernel = functools.partial(_fcn_kernel, n_hid_layers=n_hid_layers,
                               n_in=n_in, matmul_dtype=matmul_dtype)

    param_bytes = sum(int(a.size) * a.dtype.itemsize
                      for a in (w1, b1, wh, bh, we, be))
    tile_io_bytes = (n_in + n_out) * tile_batch * 4
    act_bytes = n_hidden * tile_batch * 4
    # Cap the VMEM request below physical capacity (matters on v7x: 64 MiB/TC)
    # so the compiler keeps headroom for internal scratch.
    vmem_limit = int(min(vmem_cap * 3 // 4,
                         max(16 * 1024 * 1024,
                             2 * param_bytes + 4 * tile_io_bytes
                             + 8 * act_bytes + 2 * 1024 * 1024)))

    flops = 2 * n_pad * n_hidden * (n_in + n_hid_layers * n_hidden + n_out)
    transcendentals = n_pad * n_hidden * (1 + n_hid_layers)
    bytes_accessed = param_bytes + (n_in + n_out) * n_pad * 4

    # Batch-axis semantics: on a 2-TC chip with an even grid, ask for a real
    # core split (plain "parallel" vs "arbitrary" barely changes codegen).
    if core_parallel is None:
        core_parallel = (num_cores >= 2 and grid_n >= num_cores
                         and grid_n % num_cores == 0)
    core_sem = getattr(pltpu, "CORE_PARALLEL", None)
    if core_parallel and core_sem is not None:
        dim_sem = (core_sem,)
    else:
        dim_sem = ("parallel",)

    sb = single_buffer_weights
    out_t = pl.pallas_call(
        kernel,
        out_shape=jax.ShapeDtypeStruct((n_out, n_pad), x.dtype),
        grid_spec=pltpu.PrefetchScalarGridSpec(
            num_scalar_prefetch=0,
            grid=(grid_n,),
            in_specs=[
                pl.BlockSpec((n_in, tile_batch), lambda i: (0, i)),  # x tile
                _const_spec(w1.shape, sb),
                _const_spec(b1.shape, sb),
                _const_spec(wh.shape, sb),
                _const_spec(bh.shape, sb),
                _const_spec(we.shape, sb),
                _const_spec(be.shape, sb),
            ],
            out_specs=pl.BlockSpec((n_out, tile_batch), lambda i: (0, i)),
        ),
        compiler_params=pltpu.CompilerParams(
            dimension_semantics=dim_sem,
            vmem_limit_bytes=vmem_limit,
        ),
        cost_estimate=pl.CostEstimate(
            flops=flops,
            transcendentals=transcendentals,
            bytes_accessed=bytes_accessed),
    )(xt, w1, b1, wh, bh, we, be)

    return out_t[:, :n].T  # back to (N, n_out)


def init_fcn_params(key, n_input, n_output, n_hidden, n_layers):
    """torch.nn.Linear-style init: U(-1/sqrt(fan_in), 1/sqrt(fan_in)),
    weights stored (out_features, in_features) like torch."""
    keys = jax.random.split(key, 6)

    def lin(kw, kb, fan_in, fan_out):
        bound = 1.0 / (fan_in ** 0.5)
        w = jax.random.uniform(kw, (fan_out, fan_in), jnp.float32, -bound, bound)
        b = jax.random.uniform(kb, (fan_out, 1), jnp.float32, -bound, bound)
        return w, b

    w1, b1 = lin(keys[0], keys[1], n_input, n_hidden)

    n_hid = n_layers - 1
    if n_hid > 0:
        kwh = jax.random.split(keys[2], n_hid)
        kbh = jax.random.split(keys[3], n_hid)
        whs, bhs = [], []
        for l in range(n_hid):
            w, b = lin(kwh[l], kbh[l], n_hidden, n_hidden)
            whs.append(w)
            bhs.append(b)
        wh = jnp.stack(whs, axis=0)
        bh = jnp.stack(bhs, axis=0)
    else:
        wh = jnp.zeros((0, n_hidden, n_hidden), jnp.float32)
        bh = jnp.zeros((0, n_hidden, 1), jnp.float32)

    we, be = lin(keys[4], keys[5], n_hidden, n_output)
    return dict(w1=w1, b1=b1, wh=wh, bh=bh, we=we, be=be)


def fcn_reference(x, params):
    """Pure-JAX reference for correctness checking."""
    h = jnp.tanh(x @ params["w1"].T + params["b1"].T)
    for l in range(params["wh"].shape[0]):
        h = jnp.tanh(h @ params["wh"][l].T + params["bh"][l].T)
    return h @ params["we"].T + params["be"].T


if __name__ == "__main__":
    # Shapes matching the PINN spec: x = linspace(0, 1, 500).view(-1, 1),
    # FCN(n_input=1, n_output=1, n_hidden=32, n_layers=3).
    n_input, n_output, n_hidden, n_layers = 1, 1, 32, 3
    n_points = 500

    key = jax.random.PRNGKey(0)
    params = init_fcn_params(key, n_input, n_output, n_hidden, n_layers)
    x = jnp.linspace(0.0, 1.0, n_points, dtype=jnp.float32).reshape(-1, 1)

    def run(p, **kw):
        fn = jax.jit(functools.partial(fcn_forward, **kw))
        return jax.block_until_ready(fn(x, p))

    # Auto-tuned path first; fall back to the plainest config if this Pallas
    # build rejects Buffered(1) single-buffering or CORE_PARALLEL at lowering.
    fallback_kw = {}
    try:
        out = run(params)
    except Exception:
        fallback_kw = dict(single_buffer_weights=False, core_parallel=False)
        out = run(params, **fallback_kw)

    ref = fcn_reference(x, params)
    assert out.shape == (n_points, n_output)
    assert jnp.allclose(out, ref, atol=1e-5, rtol=1e-5)

    # Edge case: n_layers == 1 (empty hidden stack).
    params1 = init_fcn_params(key, n_input, n_output, n_hidden, 1)
    out1 = run(params1, **fallback_kw)
    assert jnp.allclose(out1, fcn_reference(x, params1), atol=1e-5, rtol=1e-5)

    print("KERNEL_OK")
</pallas_src>

<mosaic_0001>
module attributes {stable_mosaic.version = 11 : i64} {
  func.func @_fcn_kernel(%arg0: i32, %arg1: memref<1x512xf32, #tpu.memory_space<vmem>>, %arg2: memref<32x1xf32, #tpu.memory_space<vmem>>, %arg3: memref<32x1xf32, #tpu.memory_space<vmem>>, %arg4: memref<2x32x32xf32, #tpu.memory_space<vmem>>, %arg5: memref<2x32x1xf32, #tpu.memory_space<vmem>>, %arg6: memref<1x32xf32, #tpu.memory_space<vmem>>, %arg7: memref<1x1xf32, #tpu.memory_space<vmem>>, %arg8: memref<1x512xf32, #tpu.memory_space<vmem>>) attributes {dimension_semantics = [#tpu.dimension_semantics<parallel>], iteration_bounds = array<i64: 1>, scalar_prefetch = 0 : i64, scratch_operands = 0 : i64, tpu.core_type = #tpu.core_type<tc>, window_params = [{transform_indices = @transform_0, window_bounds = array<i64: 1, 512>}, {pipeline_mode = #tpu.pipeline_mode<synchronous>, transform_indices = @transform_1, window_bounds = array<i64: 32, 1>}, {pipeline_mode = #tpu.pipeline_mode<synchronous>, transform_indices = @transform_2, window_bounds = array<i64: 32, 1>}, {pipeline_mode = #tpu.pipeline_mode<synchronous>, transform_indices = @transform_3, window_bounds = array<i64: 2, 32, 32>}, {pipeline_mode = #tpu.pipeline_mode<synchronous>, transform_indices = @transform_4, window_bounds = array<i64: 2, 32, 1>}, {pipeline_mode = #tpu.pipeline_mode<synchronous>, transform_indices = @transform_5, window_bounds = array<i64: 1, 32>}, {pipeline_mode = #tpu.pipeline_mode<synchronous>, transform_indices = @transform_6, window_bounds = array<i64: 1, 1>}, {transform_indices = @transform_7, window_bounds = array<i64: 1, 512>}]} {
    %c0 = arith.constant 0 : index
    %c0_0 = arith.constant 0 : index
    %0 = vector.load %arg1[%c0, %c0_0] : memref<1x512xf32, #tpu.memory_space<vmem>>, vector<1x512xf32>
    %c0_1 = arith.constant 0 : index
    %c0_2 = arith.constant 0 : index
    %1 = vector.load %arg2[%c0_1, %c0_2] : memref<32x1xf32, #tpu.memory_space<vmem>>, vector<32x1xf32>
    %c0_3 = arith.constant 0 : index
    %c0_4 = arith.constant 0 : index
    %2 = vector.load %arg3[%c0_3, %c0_4] : memref<32x1xf32, #tpu.memory_space<vmem>>, vector<32x1xf32>
    %3 = vector.broadcast %1 : vector<32x1xf32> to vector<32x512xf32>
    %4 = vector.broadcast %0 : vector<1x512xf32> to vector<32x512xf32>
    %5 = arith.mulf %3, %4 : vector<32x512xf32>
    %6 = vector.broadcast %2 : vector<32x1xf32> to vector<32x512xf32>
    %7 = arith.addf %5, %6 : vector<32x512xf32>
    %8 = math.tanh %7 : vector<32x512xf32>
    %c0_5 = arith.constant 0 : index
    %c0_6 = arith.constant 0 : index
    %c0_7 = arith.constant 0 : index
    %9 = vector.load %arg4[%c0_5, %c0_6, %c0_7] : memref<2x32x32xf32, #tpu.memory_space<vmem>>, vector<1x32x32xf32>
    %10 = vector.shape_cast %9 : vector<1x32x32xf32> to vector<32x32xf32>
    %cst = arith.constant dense<0.000000e+00> : vector<32x512xf32>
    %11 = tpu.matmul %10, %8, %cst {dimension_numbers = #tpu.dot_dimension_numbers<[1], [0], [0], [1], [0, 0, 1, 1], [], []>} : vector<32x32xf32>, vector<32x512xf32>, vector<32x512xf32> -> vector<32x512xf32>
    %c0_8 = arith.constant 0 : index
    %c0_9 = arith.constant 0 : index
    %c0_10 = arith.constant 0 : index
    %12 = vector.load %arg5[%c0_8, %c0_9, %c0_10] : memref<2x32x1xf32, #tpu.memory_space<vmem>>, vector<1x32x1xf32>
    %13 = vector.shape_cast %12 : vector<1x32x1xf32> to vector<32x1xf32>
    %14 = vector.broadcast %13 : vector<32x1xf32> to vector<32x512xf32>
    %15 = arith.addf %11, %14 : vector<32x512xf32>
    %16 = math.tanh %15 : vector<32x512xf32>
    %c1 = arith.constant 1 : index
    %c0_11 = arith.constant 0 : index
    %c0_12 = arith.constant 0 : index
    %17 = vector.load %arg4[%c1, %c0_11, %c0_12] : memref<2x32x32xf32, #tpu.memory_space<vmem>>, vector<1x32x32xf32>
    %18 = vector.shape_cast %17 : vector<1x32x32xf32> to vector<32x32xf32>
    %cst_13 = arith.constant dense<0.000000e+00> : vector<32x512xf32>
    %19 = tpu.matmul %18, %16, %cst_13 {dimension_numbers = #tpu.dot_dimension_numbers<[1], [0], [0], [1], [0, 0, 1, 1], [], []>} : vector<32x32xf32>, vector<32x512xf32>, vector<32x512xf32> -> vector<32x512xf32>
    %c1_14 = arith.constant 1 : index
    %c0_15 = arith.constant 0 : index
    %c0_16 = arith.constant 0 : index
    %20 = vector.load %arg5[%c1_14, %c0_15, %c0_16] : memref<2x32x1xf32, #tpu.memory_space<vmem>>, vector<1x32x1xf32>
    %21 = vector.shape_cast %20 : vector<1x32x1xf32> to vector<32x1xf32>
    %22 = vector.broadcast %21 : vector<32x1xf32> to vector<32x512xf32>
    %23 = arith.addf %19, %22 : vector<32x512xf32>
    %24 = math.tanh %23 : vector<32x512xf32>
    %c0_17 = arith.constant 0 : index
    %c0_18 = arith.constant 0 : index
    %25 = vector.load %arg6[%c0_17, %c0_18] : memref<1x32xf32, #tpu.memory_space<vmem>>, vector<1x32xf32>
    %cst_19 = arith.constant dense<0.000000e+00> : vector<1x512xf32>
    %26 = tpu.matmul %25, %24, %cst_19 {dimension_numbers = #tpu.dot_dimension_numbers<[1], [0], [0], [1], [0, 0, 1, 1], [], []>} : vector<1x32xf32>, vector<32x512xf32>, vector<1x512xf32> -> vector<1x512xf32>
    %c0_20 = arith.constant 0 : index
    %c0_21 = arith.constant 0 : index
    %27 = vector.load %arg7[%c0_20, %c0_21] : memref<1x1xf32, #tpu.memory_space<vmem>>, vector<1x1xf32>
    %28 = vector.broadcast %27 : vector<1x1xf32> to vector<1x512xf32>
    %29 = arith.addf %26, %28 : vector<1x512xf32>
    %c0_22 = arith.constant 0 : index
    %c0_23 = arith.constant 0 : index
    %30 = vector.load %arg8[%c0_22, %c0_23] : memref<1x512xf32, #tpu.memory_space<vmem>>, vector<1x512xf32>
    tpu.vector_store %arg8[%c0_22, %c0_23], %29 {strides = array<i32>} : memref<1x512xf32, #tpu.memory_space<vmem>>, vector<1x512xf32>,
    return
  }
  func.func @transform_0(%arg0: i32) -> (i32, i32) {
    %c0_i32 = arith.constant 0 : i32
    %c0_i32_0 = arith.constant 0 : i32
    return %c0_i32, %arg0 : i32, i32
  }
  func.func @transform_1(%arg0: i32) -> (i32, i32) {
    %c0_i32 = arith.constant 0 : i32
    %c0_i32_0 = arith.constant 0 : i32
    %c0_i32_1 = arith.constant 0 : i32
    return %c0_i32, %c0_i32_0 : i32, i32
  }
  func.func @transform_2(%arg0: i32) -> (i32, i32) {
    %c0_i32 = arith.constant 0 : i32
    %c0_i32_0 = arith.constant 0 : i32
    %c0_i32_1 = arith.constant 0 : i32
    return %c0_i32, %c0_i32_0 : i32, i32
  }
  func.func @transform_3(%arg0: i32) -> (i32, i32, i32) {
    %c0_i32 = arith.constant 0 : i32
    %c0_i32_0 = arith.constant 0 : i32
    %c0_i32_1 = arith.constant 0 : i32
    %c0_i32_2 = arith.constant 0 : i32
    return %c0_i32, %c0_i32_0, %c0_i32_1 : i32, i32, i32
  }
  func.func @transform_4(%arg0: i32) -> (i32, i32, i32) {
    %c0_i32 = arith.constant 0 : i32
    %c0_i32_0 = arith.constant 0 : i32
    %c0_i32_1 = arith.constant 0 : i32
    %c0_i32_2 = arith.constant 0 : i32
    return %c0_i32, %c0_i32_0, %c0_i32_1 : i32, i32, i32
  }
  func.func @transform_5(%arg0: i32) -> (i32, i32) {
    %c0_i32 = arith.constant 0 : i32
    %c0_i32_0 = arith.constant 0 : i32
    %c0_i32_1 = arith.constant 0 : i32
    return %c0_i32, %c0_i32_0 : i32, i32
  }
  func.func @transform_6(%arg0: i32) -> (i32, i32) {
    %c0_i32 = arith.constant 0 : i32
    %c0_i32_0 = arith.constant 0 : i32
    %c0_i32_1 = arith.constant 0 : i32
    return %c0_i32, %c0_i32_0 : i32, i32
  }
  func.func @transform_7(%arg0: i32) -> (i32, i32) {
    %c0_i32 = arith.constant 0 : i32
    %c0_i32_0 = arith.constant 0 : i32
    return %c0_i32, %arg0 : i32, i32
  }
}

module attributes {stable_mosaic.version = 11 : i64} {
  func.func @_fcn_kernel(%arg0: i32, %arg1: memref<1x512xf32, #tpu.memory_space<vmem>>, %arg2: memref<32x1xf32, #tpu.memory_space<vmem>>, %arg3: memref<32x1xf32, #tpu.memory_space<vmem>>, %arg4: memref<2x32x32xf32, #tpu.memory_space<vmem>>, %arg5: memref<2x32x1xf32, #tpu.memory_space<vmem>>, %arg6: memref<1x32xf32, #tpu.memory_space<vmem>>, %arg7: memref<1x1xf32, #tpu.memory_space<vmem>>, %arg8: memref<1x512xf32, #tpu.memory_space<vmem>>) attributes {dimension_semantics = [#tpu.dimension_semantics<parallel>], iteration_bounds = array<i64: 1>, scalar_prefetch = 0 : i64, scratch_operands = 0 : i64, tpu.core_type = #tpu.core_type<tc>, window_params = [{transform_indices = @transform_0, window_bounds = array<i64: 1, 512>}, {pipeline_mode = #tpu.pipeline_mode<synchronous>, transform_indices = @transform_1, window_bounds = array<i64: 32, 1>}, {pipeline_mode = #tpu.pipeline_mode<synchronous>, transform_indices = @transform_2, window_bounds = array<i64: 32, 1>}, {pipeline_mode = #tpu.pipeline_mode<synchronous>, transform_indices = @transform_3, window_bounds = array<i64: 2, 32, 32>}, {pipeline_mode = #tpu.pipeline_mode<synchronous>, transform_indices = @transform_4, window_bounds = array<i64: 2, 32, 1>}, {pipeline_mode = #tpu.pipeline_mode<synchronous>, transform_indices = @transform_5, window_bounds = array<i64: 1, 32>}, {pipeline_mode = #tpu.pipeline_mode<synchronous>, transform_indices = @transform_6, window_bounds = array<i64: 1, 1>}, {transform_indices = @transform_7, window_bounds = array<i64: 1, 512>}]} {
    %c0 = arith.constant 0 : index
    %c0_0 = arith.constant 0 : index
    %0 = vector.load %arg1[%c0, %c0_0] : memref<1x512xf32, #tpu.memory_space<vmem>>, vector<1x512xf32>
    %c0_1 = arith.constant 0 : index
    %c0_2 = arith.constant 0 : index
    %1 = vector.load %arg2[%c0_1, %c0_2] : memref<32x1xf32, #tpu.memory_space<vmem>>, vector<32x1xf32>
    %c0_3 = arith.constant 0 : index
    %c0_4 = arith.constant 0 : index
    %2 = vector.load %arg3[%c0_3, %c0_4] : memref<32x1xf32, #tpu.memory_space<vmem>>, vector<32x1xf32>
    %3 = vector.broadcast %1 : vector<32x1xf32> to vector<32x512xf32>
    %4 = vector.broadcast %0 : vector<1x512xf32> to vector<32x512xf32>
    %5 = arith.mulf %3, %4 : vector<32x512xf32>
    %6 = vector.broadcast %2 : vector<32x1xf32> to vector<32x512xf32>
    %7 = arith.addf %5, %6 : vector<32x512xf32>
    %8 = math.tanh %7 : vector<32x512xf32>
    %c0_5 = arith.constant 0 : index
    %c0_6 = arith.constant 0 : index
    %c0_7 = arith.constant 0 : index
    %9 = vector.load %arg4[%c0_5, %c0_6, %c0_7] : memref<2x32x32xf32, #tpu.memory_space<vmem>>, vector<1x32x32xf32>
    %10 = vector.shape_cast %9 : vector<1x32x32xf32> to vector<32x32xf32>
    %cst = arith.constant dense<0.000000e+00> : vector<32x512xf32>
    %11 = tpu.matmul %10, %8, %cst {dimension_numbers = #tpu.dot_dimension_numbers<[1], [0], [0], [1], [0, 0, 1, 1], [], []>} : vector<32x32xf32>, vector<32x512xf32>, vector<32x512xf32> -> vector<32x512xf32>
    %c0_8 = arith.constant 0 : index
    %c0_9 = arith.constant 0 : index
    %c0_10 = arith.constant 0 : index
    %12 = vector.load %arg5[%c0_8, %c0_9, %c0_10] : memref<2x32x1xf32, #tpu.memory_space<vmem>>, vector<1x32x1xf32>
    %13 = vector.shape_cast %12 : vector<1x32x1xf32> to vector<32x1xf32>
    %14 = vector.broadcast %13 : vector<32x1xf32> to vector<32x512xf32>
    %15 = arith.addf %11, %14 : vector<32x512xf32>
    %16 = math.tanh %15 : vector<32x512xf32>
    %c1 = arith.constant 1 : index
    %c0_11 = arith.constant 0 : index
    %c0_12 = arith.constant 0 : index
    %17 = vector.load %arg4[%c1, %c0_11, %c0_12] : memref<2x32x32xf32, #tpu.memory_space<vmem>>, vector<1x32x32xf32>
    %18 = vector.shape_cast %17 : vector<1x32x32xf32> to vector<32x32xf32>
    %cst_13 = arith.constant dense<0.000000e+00> : vector<32x512xf32>
    %19 = tpu.matmul %18, %16, %cst_13 {dimension_numbers = #tpu.dot_dimension_numbers<[1], [0], [0], [1], [0, 0, 1, 1], [], []>} : vector<32x32xf32>, vector<32x512xf32>, vector<32x512xf32> -> vector<32x512xf32>
    %c1_14 = arith.constant 1 : index
    %c0_15 = arith.constant 0 : index
    %c0_16 = arith.constant 0 : index
    %20 = vector.load %arg5[%c1_14, %c0_15, %c0_16] : memref<2x32x1xf32, #tpu.memory_space<vmem>>, vector<1x32x1xf32>
    %21 = vector.shape_cast %20 : vector<1x32x1xf32> to vector<32x1xf32>
    %22 = vector.broadcast %21 : vector<32x1xf32> to vector<32x512xf32>
    %23 = arith.addf %19, %22 : vector<32x512xf32>
    %24 = math.tanh %23 : vector<32x512xf32>
    %c0_17 = arith.constant 0 : index
    %c0_18 = arith.constant 0 : index
    %25 = vector.load %arg6[%c0_17, %c0_18] : memref<1x32xf32, #tpu.memory_space<vmem>>, vector<1x32xf32>
    %cst_19 = arith.constant dense<0.000000e+00> : vector<1x512xf32>
    %26 = tpu.matmul %25, %24, %cst_19 {dimension_numbers = #tpu.dot_dimension_numbers<[1], [0], [0], [1], [0, 0, 1, 1], [], []>} : vector<1x32xf32>, vector<32x512xf32>, vector<1x512xf32> -> vector<1x512xf32>
    %c0_20 = arith.constant 0 : index
    %c0_21 = arith.constant 0 : index
    %27 = vector.load %arg7[%c0_20, %c0_21] : memref<1x1xf32, #tpu.memory_space<vmem>>, vector<1x1xf32>
    %28 = vector.broadcast %27 : vector<1x1xf32> to vector<1x512xf32>
    %29 = arith.addf %26, %28 : vector<1x512xf32>
    %c0_22 = arith.constant 0 : index
    %c0_23 = arith.constant 0 : index
    %30 = vector.load %arg8[%c0_22, %c0_23] : memref<1x512xf32, #tpu.memory_space<vmem>>, vector<1x512xf32>
    tpu.vector_store %arg8[%c0_22, %c0_23], %29 {strides = array<i32>} : memref<1x512xf32, #tpu.memory_space<vmem>>, vector<1x512xf32>,
    return
  }
  func.func @transform_0(%arg0: i32) -> (i32, i32) {
    %c0_i32 = arith.constant 0 : i32
    %c0_i32_0 = arith.constant 0 : i32
    return %c0_i32, %arg0 : i32, i32
  }
  func.func @transform_1(%arg0: i32) -> (i32, i32) {
    %c0_i32 = arith.constant 0 : i32
    %c0_i32_0 = arith.constant 0 : i32
    %c0_i32_1 = arith.constant 0 : i32
    return %c0_i32, %c0_i32_0 : i32, i32
  }
  func.func @transform_2(%arg0: i32) -> (i32, i32) {
    %c0_i32 = arith.constant 0 : i32
    %c0_i32_0 = arith.constant 0 : i32
    %c0_i32_1 = arith.constant 0 : i32
    return %c0_i32, %c0_i32_0 : i32, i32
  }
  func.func @transform_3(%arg0: i32) -> (i32, i32, i32) {
    %c0_i32 = arith.constant 0 : i32
    %c0_i32_0 = arith.constant 0 : i32
    %c0_i32_1 = arith.constant 0 : i32
    %c0_i32_2 = arith.constant 0 : i32
    return %c0_i32, %c0_i32_0, %c0_i32_1 : i32, i32, i32
  }
  func.func @transform_4(%arg0: i32) -> (i32, i32, i32) {
    %c0_i32 = arith.constant 0 : i32
    %c0_i32_0 = arith.constant 0 : i32
    %c0_i32_1 = arith.constant 0 : i32
    %c0_i32_2 = arith.constant 0 : i32
    return %c0_i32, %c0_i32_0, %c0_i32_1 : i32, i32, i32
  }
  func.func @transform_5(%arg0: i32) -> (i32, i32) {
    %c0_i32 = arith.constant 0 : i32
    %c0_i32_0 = arith.constant 0 : i32
    %c0_i32_1 = arith.constant 0 : i32
    return %c0_i32, %c0_i32_0 : i32, i32
  }
  func.func @transform_6(%arg0: i32) -> (i32, i32) {
    %c0_i32 = arith.constant 0 : i32
    %c0_i32_0 = arith.constant 0 : i32
    %c0_i32_1 = arith.constant 0 : i32
    return %c0_i32, %c0_i32_0 : i32, i32
  }
  func.func @transform_7(%arg0: i32) -> (i32, i32) {
    %c0_i32 = arith.constant 0 : i32
    %c0_i32_0 = arith.constant 0 : i32
    return %c0_i32, %arg0 : i32, i32
  }
}

</mosaic_0001>

<llo_original>
// kernel: fcn_forward.1
$region0: #{fcn_forward.1}
  #allocation0 [shape = 'u32[]', space=smem, size = 0x4, offset = 0x4, fixed_abs, tag = 'smem constant byte address 0x4 - core index']
  #allocation1 [shape = 'u32[144,128]{1,0:T(1,128)}', space=vmem, size = 0x12000, scoped, tag = 'internal scratch']
  #allocation2 [shape = 'f32[1,1]{1,0:T(1,128)S(1)}', space=vmem, size = 0x200, scoped, tag = 'scoped memory for fcn_forward.1']
  %s0 = inlined_call_operand.vmem [shape: f32[1,512], index: 0, kind: input, shape index: {}]
  %s1 = inlined_call_operand.vmem [shape: f32[32,1], index: 1, kind: input, shape index: {}]
  %s2 = inlined_call_operand.vmem [shape: f32[32,1], index: 2, kind: input, shape index: {}]
  %s3 = inlined_call_operand.vmem [shape: f32[2,32,32], index: 3, kind: input, shape index: {}]
  %s4 = inlined_call_operand.vmem [shape: f32[2,32,1], index: 4, kind: input, shape index: {}]
  %s5 = inlined_call_operand.vmem [shape: f32[1,32], index: 5, kind: input, shape index: {}]
  %s6 = inlined_call_operand.<no memory space> [shape: f32[1,1], index: 6, kind: input, shape index: {}]
  %s7 = inlined_call_operand.vmem [shape: f32[1,512], index: 7, kind: output, shape index: {}]
  %s8 = sld [smem:[#allocation0]]
  $region38: #{fcn_forward.1} parent=0
    _
  %s10 = ssub.s32 1, %s8
  %s11 = scalar_select 0, %s10, %s8
  %v12 = vstv %s6
  %13 = vst [vmem:[#allocation2] sm:$0x1] %v12
  // Predicated region
  $region2: #{fcn_forward.1} parent=0 // pred_check
    _
  $region3: #{fcn_forward.1} parent=0 // pred_check_branch
    %15 = sbr.rel (0) target = $region5
  $region4: #{fcn_forward.1} parent=0 // pred_region
    _
  $region5: #{fcn_forward.1} parent=0 // pred_fallthru
    _
  // Predicated region
  $region6: #{fcn_forward.1} parent=0 // pred_check
    _
  $region7: #{fcn_forward.1} parent=0 // pred_check_branch
    %17 = sbr.rel (0) target = $region9
  $region8: #{fcn_forward.1} parent=0 // pred_region
    _
  $region9: #{fcn_forward.1} parent=0 // pred_fallthru
    _
  // Predicated region
  $region10: #{fcn_forward.1} parent=0 // pred_check
    _
  $region11: #{fcn_forward.1} parent=0 // pred_check_branch
    %19 = sbr.rel (0) target = $region13
  $region12: #{fcn_forward.1} parent=0 // pred_region
    _
  $region13: #{fcn_forward.1} parent=0 // pred_fallthru
    _
  // Predicated region
  $region14: #{fcn_forward.1} parent=0 // pred_check
    _
  $region15: #{fcn_forward.1} parent=0 // pred_check_branch
    %21 = sbr.rel (0) target = $region17
  $region16: #{fcn_forward.1} parent=0 // pred_region
    _
  $region17: #{fcn_forward.1} parent=0 // pred_fallthru
    _
  // Predicated region
  $region18: #{fcn_forward.1} parent=0 // pred_check
    _
  $region19: #{fcn_forward.1} parent=0 // pred_check_branch
    %23 = sbr.rel (0) target = $region21
  $region20: #{fcn_forward.1} parent=0 // pred_region
    _
  $region21: #{fcn_forward.1} parent=0 // pred_fallthru
    _
  // Predicated region
  $region22: #{fcn_forward.1} parent=0 // pred_check
    _
  $region23: #{fcn_forward.1} parent=0 // pred_check_branch
    %25 = sbr.rel (0) target = $region25
  $region24: #{fcn_forward.1} parent=0 // pred_region
    _
  $region25: #{fcn_forward.1} parent=0 // pred_fallthru
    _
  // Predicated region
  $region26: #{fcn_forward.1} parent=0 // pred_check
    _
  $region27: #{fcn_forward.1} parent=0 // pred_check_branch
    %27 = sbr.rel (0) target = $region29
  $region28: #{fcn_forward.1} parent=0 // pred_region
    _
  $region29: #{fcn_forward.1} parent=0 // pred_fallthru
    _
  %v28 = vld [vmem:[%s0] sm:$0xf]
  %v29 = vld [vmem:[%s1] sm:$0xff]
  %v30 = vld [vmem:[%s1 + $0x8] sm:$0xff]
  %v31 = vld [vmem:[%s1 + $0x10] sm:$0xff]
  %v32 = vld [vmem:[%s1 + $0x18] sm:$0xff]
  %v33 = vld [vmem:[%s2] sm:$0xff]
  %v34 = vld [vmem:[%s2 + $0x8] sm:$0xff]
  %v35 = vld [vmem:[%s2 + $0x10] sm:$0xff]
  %v36 = vld [vmem:[%s2 + $0x18] sm:$0xff]
  %38 = vset.pattern.permute.xlu0 0
  %39 = vperm.xlu0 %38, %v29
  %v40 = vpop.permute.xlu0 %39
  %43 = vset.pattern.permute.xlu0 0
  %44 = vperm.xlu0 %43, %v30
  %v45 = vpop.permute.xlu0 %44
  %48 = vset.pattern.permute.xlu0 0
  %49 = vperm.xlu0 %48, %v31
  %v50 = vpop.permute.xlu0 %49
  %53 = vset.pattern.permute.xlu0 0
  %54 = vperm.xlu0 %53, %v32
  %v55 = vpop.permute.xlu0 %54
  %v58 = vlaneseq
  %v59 = vshrl.u32 %v58, 7
  %v60 = vsub.s32 0, %v59
  %v61 = vrot.slane %v28, %v60
  %v62 = vlaneseq
  %v63 = vshrl.u32 %v62, 7
  %v64 = vsub.s32 1, %v63
  %v65 = vrot.slane %v28, %v64
  %v66 = vlaneseq
  %v67 = vshrl.u32 %v66, 7
  %v68 = vsub.s32 2, %v67
  %v69 = vrot.slane %v28, %v68
  %v70 = vlaneseq
  %v71 = vshrl.u32 %v70, 7
  %v72 = vsub.s32 3, %v71
  %v73 = vrot.slane %v28, %v72
  %v78 = vmul.f32 %v40, %v61
  %v79 = vmul.f32 %v40, %v65
  %v80 = vmul.f32 %v40, %v69
  %v81 = vmul.f32 %v40, %v73
  %v82 = vmul.f32 %v45, %v61
  %v83 = vmul.f32 %v45, %v65
  %v84 = vmul.f32 %v45, %v69
  %v85 = vmul.f32 %v45, %v73
  %v86 = vmul.f32 %v50, %v61
  %v87 = vmul.f32 %v50, %v65
  %v88 = vmul.f32 %v50, %v69
  %v89 = vmul.f32 %v50, %v73
  %v90 = vmul.f32 %v55, %v61
  %v91 = vmul.f32 %v55, %v65
  %v92 = vmul.f32 %v55, %v69
  %v93 = vmul.f32 %v55, %v73
  %95 = vset.pattern.permute.xlu0 0
  %96 = vperm.xlu0 %95, %v33
  %v97 = vpop.permute.xlu0 %96
  %100 = vset.pattern.permute.xlu0 0
  %101 = vperm.xlu0 %100, %v34
  %v102 = vpop.permute.xlu0 %101
  %105 = vset.pattern.permute.xlu0 0
  %106 = vperm.xlu0 %105, %v35
  %v107 = vpop.permute.xlu0 %106
  %110 = vset.pattern.permute.xlu0 0
  %111 = vperm.xlu0 %110, %v36
  %v112 = vpop.permute.xlu0 %111
  %v114 = vadd.f32 %v78, %v97
  %v115 = vadd.f32 %v79, %v97
  %v116 = vadd.f32 %v80, %v97
  %v117 = vadd.f32 %v81, %v97
  %v118 = vadd.f32 %v82, %v102
  %v119 = vadd.f32 %v83, %v102
  %v120 = vadd.f32 %v84, %v102
  %v121 = vadd.f32 %v85, %v102
  %v122 = vadd.f32 %v86, %v107
  %v123 = vadd.f32 %v87, %v107
  %v124 = vadd.f32 %v88, %v107
  %v125 = vadd.f32 %v89, %v107
  %v126 = vadd.f32 %v90, %v112
  %v127 = vadd.f32 %v91, %v112
  %v128 = vadd.f32 %v92, %v112
  %v129 = vadd.f32 %v93, %v112
  %v130 = vtanh.pop %v114
  %v131 = vtanh.pop %v115
  %v132 = vtanh.pop %v116
  %v133 = vtanh.pop %v117
  %v134 = vtanh.pop %v118
  %v135 = vtanh.pop %v119
  %v136 = vtanh.pop %v120
  %v137 = vtanh.pop %v121
  %v138 = vtanh.pop %v122
  %v139 = vtanh.pop %v123
  %v140 = vtanh.pop %v124
  %v141 = vtanh.pop %v125
  %v142 = vtanh.pop %v126
  %v143 = vtanh.pop %v127
  %v144 = vtanh.pop %v128
  %v145 = vtanh.pop %v129
  %v146 = vld [vmem:[%s3] sm:$0xff]
  %v147 = vld [vmem:[%s3 + $0x8] sm:$0xff]
  %v148 = vld [vmem:[%s3 + $0x10] sm:$0xff]
  %v149 = vld [vmem:[%s3 + $0x18] sm:$0xff]
  %v150 = vld [vmem:[%s4] sm:$0xff]
  %v151 = vld [vmem:[%s4 + $0x8] sm:$0xff]
  %v152 = vld [vmem:[%s4 + $0x10] sm:$0xff]
  %v153 = vld [vmem:[%s4 + $0x18] sm:$0xff]
  %155 = vset.pattern.permute.xlu0 0
  %156 = vperm.xlu0 %155, %v150
  %v157 = vpop.permute.xlu0 %156
  %160 = vset.pattern.permute.xlu0 0
  %161 = vperm.xlu0 %160, %v151
  %v162 = vpop.permute.xlu0 %161
  %165 = vset.pattern.permute.xlu0 0
  %166 = vperm.xlu0 %165, %v152
  %v167 = vpop.permute.xlu0 %166
  %170 = vset.pattern.permute.xlu0 0
  %171 = vperm.xlu0 %170, %v153
  %v172 = vpop.permute.xlu0 %171
  %vm174 = vcmask 261120
  %v176 = vsel %vm174, %v146, 0
  %v179 = vsel %vm174, %v147, 0
  %v182 = vsel %vm174, %v148, 0
  %v185 = vsel %vm174, %v149, 0
  %187 = vmatprep.subr.mxu0 0.0
  %188 = vmatpush1.msra.mxu0 0.0
  %189 = vmatprep.subr.mxu0 0.0
  %190 = vmatpush1.msra.mxu0 0.0
  %191 = vmatprep.subr.mxu0 0.0
  %192 = vmatpush1.msra.mxu0 0.0
  %193 = vmatprep.subr.mxu0 0.0
  %194 = vmatpush1.msra.mxu0 0.0
  %195 = vmatprep.subr.mxu0 0.0
  %196 = vmatpush1.msra.mxu0 0.0
  %197 = vmatprep.subr.mxu0 0.0
  %198 = vmatpush1.msra.mxu0 0.0
  %199 = vmatprep.subr.mxu0 0.0
  %200 = vmatpush1.msra.mxu0 0.0
  %201 = vmatprep.subr.mxu0 0.0
  %202 = vmatpush1.msra.mxu0 0.0
  %203 = vmatprep.subr.mxu0 0.0
  %204 = vmatpush1.msra.mxu0 0.0
  %205 = vmatprep.subr.mxu0 0.0
  %206 = vmatpush1.msra.mxu0 0.0
  %207 = vmatprep.subr.mxu0 0.0
  %208 = vmatpush1.msra.mxu0 0.0
  %209 = vmatprep.subr.mxu0 0.0
  %210 = vmatpush1.msra.mxu0 0.0
  %211 = vmatprep.subr.mxu0 %v143
  %212 = vmatpush1.msra.mxu0 %v142
  %213 = vmatprep.subr.mxu0 %v139
  %214 = vmatpush1.msra.mxu0 %v138
  %215 = vmatprep.subr.mxu0 %v135
  %216 = vmatpush1.msra.mxu0 %v134
  %217 = vmatprep.subr.mxu0 %v131
  %218 = vmatpush1.msra.mxu0 %v130
  %219 = vmatprep.subr.mxu0 0.0
  %220 = vmatpush2.msra.mxu0 0.0
  %221 = vmatprep.subr.mxu0 0.0
  %222 = vmatpush2.msra.mxu0 0.0
  %223 = vmatprep.subr.mxu0 0.0
  %224 = vmatpush2.msra.mxu0 0.0
  %225 = vmatprep.subr.mxu0 0.0
  %226 = vmatpush2.msra.mxu0 0.0
  %227 = vmatprep.subr.mxu0 0.0
  %228 = vmatpush2.msra.mxu0 0.0
  %229 = vmatprep.subr.mxu0 0.0
  %230 = vmatpush2.msra.mxu0 0.0
  %231 = vmatprep.subr.mxu0 0.0
  %232 = vmatpush2.msra.mxu0 0.0
  %233 = vmatprep.subr.mxu0 0.0
  %234 = vmatpush2.msra.mxu0 0.0
  %235 = vmatprep.subr.mxu0 0.0
  %236 = vmatpush2.msra.mxu0 0.0
  %237 = vmatprep.subr.mxu0 0.0
  %238 = vmatpush2.msra.mxu0 0.0
  %239 = vmatprep.subr.mxu0 0.0
  %240 = vmatpush2.msra.mxu0 0.0
  %241 = vmatprep.subr.mxu0 0.0
  %242 = vmatpush2.msra.mxu0 0.0
  %243 = vmatprep.subr.mxu0 0.0
  %244 = vmatpush2.msra.mxu0 0.0
  %245 = vmatprep.subr.mxu0 0.0
  %246 = vmatpush2.msra.mxu0 0.0
  %247 = vmatprep.subr.mxu0 0.0
  %248 = vmatpush2.msra.mxu0 0.0
  %249 = vmatprep.subr.mxu0 0.0
  %250 = vmatpush2.msra.mxu0 0.0
  %251 = vmatprep.mubr.f32.mxu0 0.0
  %252 = vmatmul.mubr.f32.gmra.mxu0 %v176
  %v253 = vpop.f32.mrf.mxu0
  %v254 = vadd.f32 %v157, %v253
  %v255 = vpop.f32.mrf.mxu0
  %v256 = vadd.f32 %v157, %v255
  %257 = vmatprep.mubr.f32.mxu0 0.0
  %258 = vmatmul.mubr.f32.gmra.mxu0 %v179
  %v259 = vpop.f32.mrf.mxu0
  %v260 = vadd.f32 %v162, %v259
  %v261 = vpop.f32.mrf.mxu0
  %v262 = vadd.f32 %v162, %v261
  %263 = vmatprep.mubr.f32.mxu0 0.0
  %264 = vmatmul.mubr.f32.gmra.mxu0 %v182
  %v265 = vpop.f32.mrf.mxu0
  %v266 = vadd.f32 %v167, %v265
  %v267 = vpop.f32.mrf.mxu0
  %v268 = vadd.f32 %v167, %v267
  %269 = vmatprep.mubr.f32.mxu0 0.0
  %270 = vmatmul.mubr.f32.gmra.mxu0 %v185
  %v271 = vpop.f32.mrf.mxu0
  %v272 = vadd.f32 %v172, %v271
  %v273 = vpop.f32.mrf.mxu0
  %v274 = vadd.f32 %v172, %v273
  %275 = vdwg.mxu0
  %276 = vmatprep.subr.mxu0 0.0
  %277 = vmatpush1.msra.mxu0 0.0
  %278 = vmatprep.subr.mxu0 0.0
  %279 = vmatpush1.msra.mxu0 0.0
  %280 = vmatprep.subr.mxu0 0.0
  %281 = vmatpush1.msra.mxu0 0.0
  %282 = vmatprep.subr.mxu0 0.0
  %283 = vmatpush1.msra.mxu0 0.0
  %284 = vmatprep.subr.mxu0 0.0
  %285 = vmatpush1.msra.mxu0 0.0
  %286 = vmatprep.subr.mxu0 0.0
  %287 = vmatpush1.msra.mxu0 0.0
  %288 = vmatprep.subr.mxu0 0.0
  %289 = vmatpush1.msra.mxu0 0.0
  %290 = vmatprep.subr.mxu0 0.0
  %291 = vmatpush1.msra.mxu0 0.0
  %292 = vmatprep.subr.mxu0 0.0
  %293 = vmatpush1.msra.mxu0 0.0
  %294 = vmatprep.subr.mxu0 0.0
  %295 = vmatpush1.msra.mxu0 0.0
  %296 = vmatprep.subr.mxu0 0.0
  %297 = vmatpush1.msra.mxu0 0.0
  %298 = vmatprep.subr.mxu0 0.0
  %299 = vmatpush1.msra.mxu0 0.0
  %300 = vmatprep.subr.mxu0 %v145
  %301 = vmatpush1.msra.mxu0 %v144
  %302 = vmatprep.subr.mxu0 %v141
  %303 = vmatpush1.msra.mxu0 %v140
  %304 = vmatprep.subr.mxu0 %v137
  %305 = vmatpush1.msra.mxu0 %v136
  %306 = vmatprep.subr.mxu0 %v133
  %307 = vmatpush1.msra.mxu0 %v132
  %308 = vmatprep.subr.mxu0 0.0
  %309 = vmatpush2.msra.mxu0 0.0
  %310 = vmatprep.subr.mxu0 0.0
  %311 = vmatpush2.msra.mxu0 0.0
  %312 = vmatprep.subr.mxu0 0.0
  %313 = vmatpush2.msra.mxu0 0.0
  %314 = vmatprep.subr.mxu0 0.0
  %315 = vmatpush2.msra.mxu0 0.0
  %316 = vmatprep.subr.mxu0 0.0
  %317 = vmatpush2.msra.mxu0 0.0
  %318 = vmatprep.subr.mxu0 0.0
  %319 = vmatpush2.msra.mxu0 0.0
  %320 = vmatprep.subr.mxu0 0.0
  %321 = vmatpush2.msra.mxu0 0.0
  %322 = vmatprep.subr.mxu0 0.0
  %323 = vmatpush2.msra.mxu0 0.0
  %324 = vmatprep.subr.mxu0 0.0
  %325 = vmatpush2.msra.mxu0 0.0
  %326 = vmatprep.subr.mxu0 0.0
  %327 = vmatpush2.msra.mxu0 0.0
  %328 = vmatprep.subr.mxu0 0.0
  %329 = vmatpush2.msra.mxu0 0.0
  %330 = vmatprep.subr.mxu0 0.0
  %331 = vmatpush2.msra.mxu0 0.0
  %332 = vmatprep.subr.mxu0 0.0
  %333 = vmatpush2.msra.mxu0 0.0
  %334 = vmatprep.subr.mxu0 0.0
  %335 = vmatpush2.msra.mxu0 0.0
  %336 = vmatprep.subr.mxu0 0.0
  %337 = vmatpush2.msra.mxu0 0.0
  %338 = vmatprep.subr.mxu0 0.0
  %339 = vmatpush2.msra.mxu0 0.0
  %340 = vmatprep.mubr.f32.mxu0 0.0
  %341 = vmatmul.mubr.f32.gmra.mxu0 %v176
  %v342 = vpop.f32.mrf.mxu0
  %v343 = vadd.f32 %v157, %v342
  %v344 = vpop.f32.mrf.mxu0
  %v345 = vadd.f32 %v157, %v344
  %346 = vmatprep.mubr.f32.mxu0 0.0
  %347 = vmatmul.mubr.f32.gmra.mxu0 %v179
  %v348 = vpop.f32.mrf.mxu0
  %v349 = vadd.f32 %v162, %v348
  %v350 = vpop.f32.mrf.mxu0
  %v351 = vadd.f32 %v162, %v350
  %352 = vmatprep.mubr.f32.mxu0 0.0
  %353 = vmatmul.mubr.f32.gmra.mxu0 %v182
  %v354 = vpop.f32.mrf.mxu0
  %v355 = vadd.f32 %v167, %v354
  %v356 = vpop.f32.mrf.mxu0
  %v357 = vadd.f32 %v167, %v356
  %358 = vmatprep.mubr.f32.mxu0 0.0
  %359 = vmatmul.mubr.f32.gmra.mxu0 %v185
  %v360 = vpop.f32.mrf.mxu0
  %v361 = vadd.f32 %v172, %v360
  %v362 = vpop.f32.mrf.mxu0
  %v363 = vadd.f32 %v172, %v362
  %364 = vdwg.mxu0
  %v365 = vtanh.pop %v254
  %v366 = vtanh.pop %v256
  %v367 = vtanh.pop %v343
  %v368 = vtanh.pop %v345
  %v369 = vtanh.pop %v260
  %v370 = vtanh.pop %v262
  %v371 = vtanh.pop %v349
  %v372 = vtanh.pop %v351
  %v373 = vtanh.pop %v266
  %v374 = vtanh.pop %v268
  %v375 = vtanh.pop %v355
  %v376 = vtanh.pop %v357
  %v377 = vtanh.pop %v272
  %v378 = vtanh.pop %v274
  %v379 = vtanh.pop %v361
  %v380 = vtanh.pop %v363
  %s381 = scalar_lea.vmem %s3, 32
  %v382 = vld [vmem:[%s381] sm:$0xff]
  %v383 = vld [vmem:[%s381 + $0x8] sm:$0xff]
  %v384 = vld [vmem:[%s381 + $0x10] sm:$0xff]
  %v385 = vld [vmem:[%s381 + $0x18] sm:$0xff]
  %s386 = scalar_lea.vmem %s4, 32
  %v387 = vld [vmem:[%s386] sm:$0xff]
  %v388 = vld [vmem:[%s386 + $0x8] sm:$0xff]
  %v389 = vld [vmem:[%s386 + $0x10] sm:$0xff]
  %v390 = vld [vmem:[%s386 + $0x18] sm:$0xff]
  %392 = vset.pattern.permute.xlu0 0
  %393 = vperm.xlu0 %392, %v387
  %v394 = vpop.permute.xlu0 %393
  %397 = vset.pattern.permute.xlu0 0
  %398 = vperm.xlu0 %397, %v388
  %v399 = vpop.permute.xlu0 %398
  %402 = vset.pattern.permute.xlu0 0
  %403 = vperm.xlu0 %402, %v389
  %v404 = vpop.permute.xlu0 %403
  %407 = vset.pattern.permute.xlu0 0
  %408 = vperm.xlu0 %407, %v390
  %v409 = vpop.permute.xlu0 %408
  %v412 = vsel %vm174, %v382, 0
  %v415 = vsel %vm174, %v383, 0
  %v418 = vsel %vm174, %v384, 0
  %v421 = vsel %vm174, %v385, 0
  %423 = vmatprep.subr.mxu0 0.0
  %424 = vmatpush1.msra.mxu0 0.0
  %425 = vmatprep.subr.mxu0 0.0
  %426 = vmatpush1.msra.mxu0 0.0
  %427 = vmatprep.subr.mxu0 0.0
  %428 = vmatpush1.msra.mxu0 0.0
  %429 = vmatprep.subr.mxu0 0.0
  %430 = vmatpush1.msra.mxu0 0.0
  %431 = vmatprep.subr.mxu0 0.0
  %432 = vmatpush1.msra.mxu0 0.0
  %433 = vmatprep.subr.mxu0 0.0
  %434 = vmatpush1.msra.mxu0 0.0
  %435 = vmatprep.subr.mxu0 0.0
  %436 = vmatpush1.msra.mxu0 0.0
  %437 = vmatprep.subr.mxu0 0.0
  %438 = vmatpush1.msra.mxu0 0.0
  %439 = vmatprep.subr.mxu0 0.0
  %440 = vmatpush1.msra.mxu0 0.0
  %441 = vmatprep.subr.mxu0 0.0
  %442 = vmatpush1.msra.mxu0 0.0
  %443 = vmatprep.subr.mxu0 0.0
  %444 = vmatpush1.msra.mxu0 0.0
  %445 = vmatprep.subr.mxu0 0.0
  %446 = vmatpush1.msra.mxu0 0.0
  %447 = vmatprep.subr.mxu0 %v378
  %448 = vmatpush1.msra.mxu0 %v377
  %449 = vmatprep.subr.mxu0 %v374
  %450 = vmatpush1.msra.mxu0 %v373
  %451 = vmatprep.subr.mxu0 %v370
  %452 = vmatpush1.msra.mxu0 %v369
  %453 = vmatprep.subr.mxu0 %v366
  %454 = vmatpush1.msra.mxu0 %v365
  %455 = vmatprep.subr.mxu0 0.0
  %456 = vmatpush2.msra.mxu0 0.0
  %457 = vmatprep.subr.mxu0 0.0
  %458 = vmatpush2.msra.mxu0 0.0
  %459 = vmatprep.subr.mxu0 0.0
  %460 = vmatpush2.msra.mxu0 0.0
  %461 = vmatprep.subr.mxu0 0.0
  %462 = vmatpush2.msra.mxu0 0.0
  %463 = vmatprep.subr.mxu0 0.0
  %464 = vmatpush2.msra.mxu0 0.0
  %465 = vmatprep.subr.mxu0 0.0
  %466 = vmatpush2.msra.mxu0 0.0
  %467 = vmatprep.subr.mxu0 0.0
  %468 = vmatpush2.msra.mxu0 0.0
  %469 = vmatprep.subr.mxu0 0.0
  %470 = vmatpush2.msra.mxu0 0.0
  %471 = vmatprep.subr.mxu0 0.0
  %472 = vmatpush2.msra.mxu0 0.0
  %473 = vmatprep.subr.mxu0 0.0
  %474 = vmatpush2.msra.mxu0 0.0
  %475 = vmatprep.subr.mxu0 0.0
  %476 = vmatpush2.msra.mxu0 0.0
  %477 = vmatprep.subr.mxu0 0.0
  %478 = vmatpush2.msra.mxu0 0.0
  %479 = vmatprep.subr.mxu0 0.0
  %480 = vmatpush2.msra.mxu0 0.0
  %481 = vmatprep.subr.mxu0 0.0
  %482 = vmatpush2.msra.mxu0 0.0
  %483 = vmatprep.subr.mxu0 0.0
  %484 = vmatpush2.msra.mxu0 0.0
  %485 = vmatprep.subr.mxu0 0.0
  %486 = vmatpush2.msra.mxu0 0.0
  %487 = vmatprep.mubr.f32.mxu0 0.0
  %488 = vmatmul.mubr.f32.gmra.mxu0 %v412
  %v489 = vpop.f32.mrf.mxu0
  %v490 = vadd.f32 %v394, %v489
  %v491 = vpop.f32.mrf.mxu0
  %v492 = vadd.f32 %v394, %v491
  %493 = vmatprep.mubr.f32.mxu0 0.0
  %494 = vmatmul.mubr.f32.gmra.mxu0 %v415
  %v495 = vpop.f32.mrf.mxu0
  %v496 = vadd.f32 %v399, %v495
  %v497 = vpop.f32.mrf.mxu0
  %v498 = vadd.f32 %v399, %v497
  %499 = vmatprep.mubr.f32.mxu0 0.0
  %500 = vmatmul.mubr.f32.gmra.mxu0 %v418
  %v501 = vpop.f32.mrf.mxu0
  %v502 = vadd.f32 %v404, %v501
  %v503 = vpop.f32.mrf.mxu0
  %v504 = vadd.f32 %v404, %v503
  %505 = vmatprep.mubr.f32.mxu0 0.0
  %506 = vmatmul.mubr.f32.gmra.mxu0 %v421
  %v507 = vpop.f32.mrf.mxu0
  %v508 = vadd.f32 %v409, %v507
  %v509 = vpop.f32.mrf.mxu0
  %v510 = vadd.f32 %v409, %v509
  %511 = vdwg.mxu0
  %512 = vmatprep.subr.mxu0 0.0
  %513 = vmatpush1.msra.mxu0 0.0
  %514 = vmatprep.subr.mxu0 0.0
  %515 = vmatpush1.msra.mxu0 0.0
  %516 = vmatprep.subr.mxu0 0.0
  %517 = vmatpush1.msra.mxu0 0.0
  %518 = vmatprep.subr.mxu0 0.0
  %519 = vmatpush1.msra.mxu0 0.0
  %520 = vmatprep.subr.mxu0 0.0
  %521 = vmatpush1.msra.mxu0 0.0
  %522 = vmatprep.subr.mxu0 0.0
  %523 = vmatpush1.msra.mxu0 0.0
  %524 = vmatprep.subr.mxu0 0.0
  %525 = vmatpush1.msra.mxu0 0.0
  %526 = vmatprep.subr.mxu0 0.0
  %527 = vmatpush1.msra.mxu0 0.0
  %528 = vmatprep.subr.mxu0 0.0
  %529 = vmatpush1.msra.mxu0 0.0
  %530 = vmatprep.subr.mxu0 0.0
  %531 = vmatpush1.msra.mxu0 0.0
  %532 = vmatprep.subr.mxu0 0.0
  %533 = vmatpush1.msra.mxu0 0.0
  %534 = vmatprep.subr.mxu0 0.0
  %535 = vmatpush1.msra.mxu0 0.0
  %536 = vmatprep.subr.mxu0 %v380
  %537 = vmatpush1.msra.mxu0 %v379
  %538 = vmatprep.subr.mxu0 %v376
  %539 = vmatpush1.msra.mxu0 %v375
  %540 = vmatprep.subr.mxu0 %v372
  %541 = vmatpush1.msra.mxu0 %v371
  %542 = vmatprep.subr.mxu0 %v368
  %543 = vmatpush1.msra.mxu0 %v367
  %544 = vmatprep.subr.mxu0 0.0
  %545 = vmatpush2.msra.mxu0 0.0
  %546 = vmatprep.subr.mxu0 0.0
  %547 = vmatpush2.msra.mxu0 0.0
  %548 = vmatprep.subr.mxu0 0.0
  %549 = vmatpush2.msra.mxu0 0.0
  %550 = vmatprep.subr.mxu0 0.0
  %551 = vmatpush2.msra.mxu0 0.0
  %552 = vmatprep.subr.mxu0 0.0
  %553 = vmatpush2.msra.mxu0 0.0
  %554 = vmatprep.subr.mxu0 0.0
  %555 = vmatpush2.msra.mxu0 0.0
  %556 = vmatprep.subr.mxu0 0.0
  %557 = vmatpush2.msra.mxu0 0.0
  %558 = vmatprep.subr.mxu0 0.0
  %559 = vmatpush2.msra.mxu0 0.0
  %560 = vmatprep.subr.mxu0 0.0
  %561 = vmatpush2.msra.mxu0 0.0
  %562 = vmatprep.subr.mxu0 0.0
  %563 = vmatpush2.msra.mxu0 0.0
  %564 = vmatprep.subr.mxu0 0.0
  %565 = vmatpush2.msra.mxu0 0.0
  %566 = vmatprep.subr.mxu0 0.0
  %567 = vmatpush2.msra.mxu0 0.0
  %568 = vmatprep.subr.mxu0 0.0
  %569 = vmatpush2.msra.mxu0 0.0
  %570 = vmatprep.subr.mxu0 0.0
  %571 = vmatpush2.msra.mxu0 0.0
  %572 = vmatprep.subr.mxu0 0.0
  %573 = vmatpush2.msra.mxu0 0.0
  %574 = vmatprep.subr.mxu0 0.0
  %575 = vmatpush2.msra.mxu0 0.0
  %576 = vmatprep.mubr.f32.mxu0 0.0
  %577 = vmatmul.mubr.f32.gmra.mxu0 %v412
  %v578 = vpop.f32.mrf.mxu0
  %v579 = vadd.f32 %v394, %v578
  %v580 = vpop.f32.mrf.mxu0
  %v581 = vadd.f32 %v394, %v580
  %582 = vmatprep.mubr.f32.mxu0 0.0
  %583 = vmatmul.mubr.f32.gmra.mxu0 %v415
  %v584 = vpop.f32.mrf.mxu0
  %v585 = vadd.f32 %v399, %v584
  %v586 = vpop.f32.mrf.mxu0
  %v587 = vadd.f32 %v399, %v586
  %588 = vmatprep.mubr.f32.mxu0 0.0
  %589 = vmatmul.mubr.f32.gmra.mxu0 %v418
  %v590 = vpop.f32.mrf.mxu0
  %v591 = vadd.f32 %v404, %v590
  %v592 = vpop.f32.mrf.mxu0
  %v593 = vadd.f32 %v404, %v592
  %594 = vmatprep.mubr.f32.mxu0 0.0
  %595 = vmatmul.mubr.f32.gmra.mxu0 %v421
  %v596 = vpop.f32.mrf.mxu0
  %v597 = vadd.f32 %v409, %v596
  %v598 = vpop.f32.mrf.mxu0
  %v599 = vadd.f32 %v409, %v598
  %600 = vdwg.mxu0
  %v601 = vtanh.pop %v490
  %v602 = vtanh.pop %v492
  %v603 = vtanh.pop %v579
  %v604 = vtanh.pop %v581
  %v605 = vtanh.pop %v496
  %v606 = vtanh.pop %v498
  %v607 = vtanh.pop %v585
  %v608 = vtanh.pop %v587
  %v609 = vtanh.pop %v502
  %v610 = vtanh.pop %v504
  %v611 = vtanh.pop %v591
  %v612 = vtanh.pop %v593
  %v613 = vtanh.pop %v508
  %v614 = vtanh.pop %v510
  %v615 = vtanh.pop %v597
  %v616 = vtanh.pop %v599
  %v617 = vld [vmem:[%s5] sm:$0x1]
  %v618 = vld [vmem:[#allocation2] sm:$0x1]
  %620 = vset.pattern.permute.xlu0 0
  %621 = vperm.xlu0 %620, %v618
  %v622 = vpop.permute.xlu0 %621
  %v624 = vlaneseq
  %v625 = vshrl.u32 %v624, 7
  %v626 = vsub.s32 0, %v625
  %v627 = vrot.slane %v622, %v626
  %v629 = vsel %vm174, %v617, 0
  %631 = vmatprep.subr.mxu0 0.0
  %632 = vmatpush1.msra.mxu0 0.0
  %633 = vmatprep.subr.mxu0 0.0
  %634 = vmatpush1.msra.mxu0 0.0
  %635 = vmatprep.subr.mxu0 0.0
  %636 = vmatpush1.msra.mxu0 0.0
  %637 = vmatprep.subr.mxu0 0.0
  %638 = vmatpush1.msra.mxu0 0.0
  %639 = vmatprep.subr.mxu0 0.0
  %640 = vmatpush1.msra.mxu0 0.0
  %641 = vmatprep.subr.mxu0 0.0
  %642 = vmatpush1.msra.mxu0 0.0
  %643 = vmatprep.subr.mxu0 0.0
  %644 = vmatpush1.msra.mxu0 0.0
  %645 = vmatprep.subr.mxu0 0.0
  %646 = vmatpush1.msra.mxu0 0.0
  %647 = vmatprep.subr.mxu0 0.0
  %648 = vmatpush1.msra.mxu0 0.0
  %649 = vmatprep.subr.mxu0 0.0
  %650 = vmatpush1.msra.mxu0 0.0
  %651 = vmatprep.subr.mxu0 0.0
  %652 = vmatpush1.msra.mxu0 0.0
  %653 = vmatprep.subr.mxu0 0.0
  %654 = vmatpush1.msra.mxu0 0.0
  %655 = vmatprep.subr.mxu0 %v614
  %656 = vmatpush1.msra.mxu0 %v613
  %657 = vmatprep.subr.mxu0 %v610
  %658 = vmatpush1.msra.mxu0 %v609
  %659 = vmatprep.subr.mxu0 %v606
  %660 = vmatpush1.msra.mxu0 %v605
  %661 = vmatprep.subr.mxu0 %v602
  %662 = vmatpush1.msra.mxu0 %v601
  %663 = vmatprep.subr.mxu0 0.0
  %664 = vmatpush2.msra.mxu0 0.0
  %665 = vmatprep.subr.mxu0 0.0
  %666 = vmatpush2.msra.mxu0 0.0
  %667 = vmatprep.subr.mxu0 0.0
  %668 = vmatpush2.msra.mxu0 0.0
  %669 = vmatprep.subr.mxu0 0.0
  %670 = vmatpush2.msra.mxu0 0.0
  %671 = vmatprep.subr.mxu0 0.0
  %672 = vmatpush2.msra.mxu0 0.0
  %673 = vmatprep.subr.mxu0 0.0
  %674 = vmatpush2.msra.mxu0 0.0
  %675 = vmatprep.subr.mxu0 0.0
  %676 = vmatpush2.msra.mxu0 0.0
  %677 = vmatprep.subr.mxu0 0.0
  %678 = vmatpush2.msra.mxu0 0.0
  %679 = vmatprep.subr.mxu0 0.0
  %680 = vmatpush2.msra.mxu0 0.0
  %681 = vmatprep.subr.mxu0 0.0
  %682 = vmatpush2.msra.mxu0 0.0
  %683 = vmatprep.subr.mxu0 0.0
  %684 = vmatpush2.msra.mxu0 0.0
  %685 = vmatprep.subr.mxu0 0.0
  %686 = vmatpush2.msra.mxu0 0.0
  %687 = vmatprep.subr.mxu0 0.0
  %688 = vmatpush2.msra.mxu0 0.0
  %689 = vmatprep.subr.mxu0 0.0
  %690 = vmatpush2.msra.mxu0 0.0
  %691 = vmatprep.subr.mxu0 0.0
  %692 = vmatpush2.msra.mxu0 0.0
  %693 = vmatprep.subr.mxu0 0.0
  %694 = vmatpush2.msra.mxu0 0.0
  %695 = vmatprep.mubr.f32.mxu0 0.0
  %696 = vmatmul.mubr.f32.gmra.mxu0 %v629
  %v697 = vpop.f32.mrf.mxu0
  %v698 = vadd.f32 %v627, %v697
  %v699 = vpop.f32.mrf.mxu0
  %v700 = vadd.f32 %v627, %v699
  %701 = vdwg.mxu0
  %702 = vmatprep.subr.mxu0 0.0
  %703 = vmatpush1.msra.mxu0 0.0
  %704 = vmatprep.subr.mxu0 0.0
  %705 = vmatpush1.msra.mxu0 0.0
  %706 = vmatprep.subr.mxu0 0.0
  %707 = vmatpush1.msra.mxu0 0.0
  %708 = vmatprep.subr.mxu0 0.0
  %709 = vmatpush1.msra.mxu0 0.0
  %710 = vmatprep.subr.mxu0 0.0
  %711 = vmatpush1.msra.mxu0 0.0
  %712 = vmatprep.subr.mxu0 0.0
  %713 = vmatpush1.msra.mxu0 0.0
  %714 = vmatprep.subr.mxu0 0.0
  %715 = vmatpush1.msra.mxu0 0.0
  %716 = vmatprep.subr.mxu0 0.0
  %717 = vmatpush1.msra.mxu0 0.0
  %718 = vmatprep.subr.mxu0 0.0
  %719 = vmatpush1.msra.mxu0 0.0
  %720 = vmatprep.subr.mxu0 0.0
  %721 = vmatpush1.msra.mxu0 0.0
  %722 = vmatprep.subr.mxu0 0.0
  %723 = vmatpush1.msra.mxu0 0.0
  %724 = vmatprep.subr.mxu0 0.0
  %725 = vmatpush1.msra.mxu0 0.0
  %726 = vmatprep.subr.mxu0 %v616
  %727 = vmatpush1.msra.mxu0 %v615
  %728 = vmatprep.subr.mxu0 %v612
  %729 = vmatpush1.msra.mxu0 %v611
  %730 = vmatprep.subr.mxu0 %v608
  %731 = vmatpush1.msra.mxu0 %v607
  %732 = vmatprep.subr.mxu0 %v604
  %733 = vmatpush1.msra.mxu0 %v603
  %734 = vmatprep.subr.mxu0 0.0
  %735 = vmatpush2.msra.mxu0 0.0
  %736 = vmatprep.subr.mxu0 0.0
  %737 = vmatpush2.msra.mxu0 0.0
  %738 = vmatprep.subr.mxu0 0.0
  %739 = vmatpush2.msra.mxu0 0.0
  %740 = vmatprep.subr.mxu0 0.0
  %741 = vmatpush2.msra.mxu0 0.0
  %742 = vmatprep.subr.mxu0 0.0
  %743 = vmatpush2.msra.mxu0 0.0
  %744 = vmatprep.subr.mxu0 0.0
  %745 = vmatpush2.msra.mxu0 0.0
  %746 = vmatprep.subr.mxu0 0.0
  %747 = vmatpush2.msra.mxu0 0.0
  %748 = vmatprep.subr.mxu0 0.0
  %749 = vmatpush2.msra.mxu0 0.0
  %750 = vmatprep.subr.mxu0 0.0
  %751 = vmatpush2.msra.mxu0 0.0
  %752 = vmatprep.subr.mxu0 0.0
  %753 = vmatpush2.msra.mxu0 0.0
  %754 = vmatprep.subr.mxu0 0.0
  %755 = vmatpush2.msra.mxu0 0.0
  %756 = vmatprep.subr.mxu0 0.0
  %757 = vmatpush2.msra.mxu0 0.0
  %758 = vmatprep.subr.mxu0 0.0
  %759 = vmatpush2.msra.mxu0 0.0
  %760 = vmatprep.subr.mxu0 0.0
  %761 = vmatpush2.msra.mxu0 0.0
  %762 = vmatprep.subr.mxu0 0.0
  %763 = vmatpush2.msra.mxu0 0.0
  %764 = vmatprep.subr.mxu0 0.0
  %765 = vmatpush2.msra.mxu0 0.0
  %766 = vmatprep.mubr.f32.mxu0 0.0
  %767 = vmatmul.mubr.f32.gmra.mxu0 %v629
  %v768 = vpop.f32.mrf.mxu0
  %v769 = vadd.f32 %v627, %v768
  %v770 = vpop.f32.mrf.mxu0
  %v771 = vadd.f32 %v627, %v770
  %772 = vdwg.mxu0
  %v777 = vcombine.low %v698, %v700
  %v778 = vcombine.low %v769, %v771
  %v780 = vunpack.c.l.s4 1966171168
  %v781 = vunpack.c.0.s8 %v780
  %v782 = vlaneseq
  %v783 = vshrl.u32 %v782, 7
  %v784 = vsub.s32 %v781, %v783
  %v785 = vrot.slane %v777, %v784
  %v787 = vunpack.c.l.s4 1966171168
  %v788 = vunpack.c.0.s8 %v787
  %v789 = vlaneseq
  %v790 = vshrl.u32 %v789, 7
  %v791 = vsub.s32 %v788, %v790
  %v792 = vrot.slane %v778, %v791
  %v793 = vcombine.low %v785, %v792
  %v795 = vunpack.c.l.s4 1966171168
  %v796 = vunpack.c.0.s8 %v795
  %v797 = vlaneseq
  %v798 = vshrl.u32 %v797, 7
  %v799 = vsub.s32 %v796, %v798
  %v800 = vrot.slane %v793, %v799
  %v802 = vlaneseq
  %vm803 = vcmp.ge.s32.totalorder %v802, 0
  %vm804 = vcmp.lt.s32.totalorder %v802, 512
  %vm805 = vmand %vm803, %vm804
  %806 = vst.msk [vmem:[%s7] sm:$0xf] %vm805, %v800
  // Predicated region
  $region30: #{fcn_forward.1} parent=0 // pred_check
    _
  $region31: #{fcn_forward.1} parent=0 // pred_check_branch
    %808 = sbr.rel (0) target = $region33
  $region32: #{fcn_forward.1} parent=0 // pred_region
    _
  $region33: #{fcn_forward.1} parent=0 // pred_fallthru
    _
  // Predicated region
  $region34: #{fcn_forward.1} parent=0 // pred_check
    _
  $region35: #{fcn_forward.1} parent=0 // pred_check_branch
    %810 = sbr.rel (0) target = $region37
  $region36: #{fcn_forward.1} parent=0 // pred_region
    _
  $region37: #{fcn_forward.1} parent=0 // pred_fallthru
    _

// kernel: fcn_forward.1
$region0: #{fcn_forward.1}
  #allocation0 [shape = 'u32[]', space=smem, size = 0x4, offset = 0x4, fixed_abs, tag = 'smem constant byte address 0x4 - core index']
  #allocation1 [shape = 'u32[144,128]{1,0:T(1,128)}', space=vmem, size = 0x12000, scoped, tag = 'internal scratch']
  #allocation2 [shape = 'f32[1,1]{1,0:T(1,128)S(1)}', space=vmem, size = 0x200, scoped, tag = 'scoped memory for fcn_forward.1']
  %s0 = inlined_call_operand.vmem [shape: f32[1,512], index: 0, kind: input, shape index: {}]
  %s1 = inlined_call_operand.vmem [shape: f32[32,1], index: 1, kind: input, shape index: {}]
  %s2 = inlined_call_operand.vmem [shape: f32[32,1], index: 2, kind: input, shape index: {}]
  %s3 = inlined_call_operand.vmem [shape: f32[2,32,32], index: 3, kind: input, shape index: {}]
  %s4 = inlined_call_operand.vmem [shape: f32[2,32,1], index: 4, kind: input, shape index: {}]
  %s5 = inlined_call_operand.vmem [shape: f32[1,32], index: 5, kind: input, shape index: {}]
  %s6 = inlined_call_operand.<no memory space> [shape: f32[1,1], index: 6, kind: input, shape index: {}]
  %s7 = inlined_call_operand.vmem [shape: f32[1,512], index: 7, kind: output, shape index: {}]
  %s8 = sld [smem:[#allocation0]]
  $region38: #{fcn_forward.1} parent=0
    _
  %s10 = ssub.s32 1, %s8
  %s11 = scalar_select 0, %s10, %s8
  %v12 = vstv %s6
  %13 = vst [vmem:[#allocation2] sm:$0x1] %v12
  // Predicated region
  $region2: #{fcn_forward.1} parent=0 // pred_check
    _
  $region3: #{fcn_forward.1} parent=0 // pred_check_branch
    %15 = sbr.rel (0) target = $region5
  $region4: #{fcn_forward.1} parent=0 // pred_region
    _
  $region5: #{fcn_forward.1} parent=0 // pred_fallthru
    _
  // Predicated region
  $region6: #{fcn_forward.1} parent=0 // pred_check
    _
  $region7: #{fcn_forward.1} parent=0 // pred_check_branch
    %17 = sbr.rel (0) target = $region9
  $region8: #{fcn_forward.1} parent=0 // pred_region
    _
  $region9: #{fcn_forward.1} parent=0 // pred_fallthru
    _
  // Predicated region
  $region10: #{fcn_forward.1} parent=0 // pred_check
    _
  $region11: #{fcn_forward.1} parent=0 // pred_check_branch
    %19 = sbr.rel (0) target = $region13
  $region12: #{fcn_forward.1} parent=0 // pred_region
    _
  $region13: #{fcn_forward.1} parent=0 // pred_fallthru
    _
  // Predicated region
  $region14: #{fcn_forward.1} parent=0 // pred_check
    _
  $region15: #{fcn_forward.1} parent=0 // pred_check_branch
    %21 = sbr.rel (0) target = $region17
  $region16: #{fcn_forward.1} parent=0 // pred_region
    _
  $region17: #{fcn_forward.1} parent=0 // pred_fallthru
    _
  // Predicated region
  $region18: #{fcn_forward.1} parent=0 // pred_check
    _
  $region19: #{fcn_forward.1} parent=0 // pred_check_branch
    %23 = sbr.rel (0) target = $region21
  $region20: #{fcn_forward.1} parent=0 // pred_region
    _
  $region21: #{fcn_forward.1} parent=0 // pred_fallthru
    _
  // Predicated region
  $region22: #{fcn_forward.1} parent=0 // pred_check
    _
  $region23: #{fcn_forward.1} parent=0 // pred_check_branch
    %25 = sbr.rel (0) target = $region25
  $region24: #{fcn_forward.1} parent=0 // pred_region
    _
  $region25: #{fcn_forward.1} parent=0 // pred_fallthru
    _
  // Predicated region
  $region26: #{fcn_forward.1} parent=0 // pred_check
    _
  $region27: #{fcn_forward.1} parent=0 // pred_check_branch
    %27 = sbr.rel (0) target = $region29
  $region28: #{fcn_forward.1} parent=0 // pred_region
    _
  $region29: #{fcn_forward.1} parent=0 // pred_fallthru
    _
  %v28 = vld [vmem:[%s0] sm:$0xf]
  %v29 = vld [vmem:[%s1] sm:$0xff]
  %v30 = vld [vmem:[%s1 + $0x8] sm:$0xff]
  %v31 = vld [vmem:[%s1 + $0x10] sm:$0xff]
  %v32 = vld [vmem:[%s1 + $0x18] sm:$0xff]
  %v33 = vld [vmem:[%s2] sm:$0xff]
  %v34 = vld [vmem:[%s2 + $0x8] sm:$0xff]
  %v35 = vld [vmem:[%s2 + $0x10] sm:$0xff]
  %v36 = vld [vmem:[%s2 + $0x18] sm:$0xff]
  %38 = vset.pattern.permute.xlu0 0
  %39 = vperm.xlu0 %38, %v29
  %v40 = vpop.permute.xlu0 %39
  %43 = vset.pattern.permute.xlu0 0
  %44 = vperm.xlu0 %43, %v30
  %v45 = vpop.permute.xlu0 %44
  %48 = vset.pattern.permute.xlu0 0
  %49 = vperm.xlu0 %48, %v31
  %v50 = vpop.permute.xlu0 %49
  %53 = vset.pattern.permute.xlu0 0
  %54 = vperm.xlu0 %53, %v32
  %v55 = vpop.permute.xlu0 %54
  %v58 = vlaneseq
  %v59 = vshrl.u32 %v58, 7
  %v60 = vsub.s32 0, %v59
  %v61 = vrot.slane %v28, %v60
  %v62 = vlaneseq
  %v63 = vshrl.u32 %v62, 7
  %v64 = vsub.s32 1, %v63
  %v65 = vrot.slane %v28, %v64
  %v66 = vlaneseq
  %v67 = vshrl.u32 %v66, 7
  %v68 = vsub.s32 2, %v67
  %v69 = vrot.slane %v28, %v68
  %v70 = vlaneseq
  %v71 = vshrl.u32 %v70, 7
  %v72 = vsub.s32 3, %v71
  %v73 = vrot.slane %v28, %v72
  %v78 = vmul.f32 %v40, %v61
  %v79 = vmul.f32 %v40, %v65
  %v80 = vmul.f32 %v40, %v69
  %v81 = vmul.f32 %v40, %v73
  %v82 = vmul.f32 %v45, %v61
  %v83 = vmul.f32 %v45, %v65
  %v84 = vmul.f32 %v45, %v69
  %v85 = vmul.f32 %v45, %v73
  %v86 = vmul.f32 %v50, %v61
  %v87 = vmul.f32 %v50, %v65
  %v88 = vmul.f32 %v50, %v69
  %v89 = vmul.f32 %v50, %v73
  %v90 = vmul.f32 %v55, %v61
  %v91 = vmul.f32 %v55, %v65
  %v92 = vmul.f32 %v55, %v69
  %v93 = vmul.f32 %v55, %v73
  %95 = vset.pattern.permute.xlu0 0
  %96 = vperm.xlu0 %95, %v33
  %v97 = vpop.permute.xlu0 %96
  %100 = vset.pattern.permute.xlu0 0
  %101 = vperm.xlu0 %100, %v34
  %v102 = vpop.permute.xlu0 %101
  %105 = vset.pattern.permute.xlu0 0
  %106 = vperm.xlu0 %105, %v35
  %v107 = vpop.permute.xlu0 %106
  %110 = vset.pattern.permute.xlu0 0
  %111 = vperm.xlu0 %110, %v36
  %v112 = vpop.permute.xlu0 %111
  %v114 = vadd.f32 %v78, %v97
  %v115 = vadd.f32 %v79, %v97
  %v116 = vadd.f32 %v80, %v97
  %v117 = vadd.f32 %v81, %v97
  %v118 = vadd.f32 %v82, %v102
  %v119 = vadd.f32 %v83, %v102
  %v120 = vadd.f32 %v84, %v102
  %v121 = vadd.f32 %v85, %v102
  %v122 = vadd.f32 %v86, %v107
  %v123 = vadd.f32 %v87, %v107
  %v124 = vadd.f32 %v88, %v107
  %v125 = vadd.f32 %v89, %v107
  %v126 = vadd.f32 %v90, %v112
  %v127 = vadd.f32 %v91, %v112
  %v128 = vadd.f32 %v92, %v112
  %v129 = vadd.f32 %v93, %v112
  %v130 = vtanh.pop %v114
  %v131 = vtanh.pop %v115
  %v132 = vtanh.pop %v116
  %v133 = vtanh.pop %v117
  %v134 = vtanh.pop %v118
  %v135 = vtanh.pop %v119
  %v136 = vtanh.pop %v120
  %v137 = vtanh.pop %v121
  %v138 = vtanh.pop %v122
  %v139 = vtanh.pop %v123
  %v140 = vtanh.pop %v124
  %v141 = vtanh.pop %v125
  %v142 = vtanh.pop %v126
  %v143 = vtanh.pop %v127
  %v144 = vtanh.pop %v128
  %v145 = vtanh.pop %v129
  %v146 = vld [vmem:[%s3] sm:$0xff]
  %v147 = vld [vmem:[%s3 + $0x8] sm:$0xff]
  %v148 = vld [vmem:[%s3 + $0x10] sm:$0xff]
  %v149 = vld [vmem:[%s3 + $0x18] sm:$0xff]
  %v150 = vld [vmem:[%s4] sm:$0xff]
  %v151 = vld [vmem:[%s4 + $0x8] sm:$0xff]
  %v152 = vld [vmem:[%s4 + $0x10] sm:$0xff]
  %v153 = vld [vmem:[%s4 + $0x18] sm:$0xff]
  %155 = vset.pattern.permute.xlu0 0
  %156 = vperm.xlu0 %155, %v150
  %v157 = vpop.permute.xlu0 %156
  %160 = vset.pattern.permute.xlu0 0
  %161 = vperm.xlu0 %160, %v151
  %v162 = vpop.permute.xlu0 %161
  %165 = vset.pattern.permute.xlu0 0
  %166 = vperm.xlu0 %165, %v152
  %v167 = vpop.permute.xlu0 %166
  %170 = vset.pattern.permute.xlu0 0
  %171 = vperm.xlu0 %170, %v153
  %v172 = vpop.permute.xlu0 %171
  %vm174 = vcmask 261120
  %v176 = vsel %vm174, %v146, 0
  %v179 = vsel %vm174, %v147, 0
  %v182 = vsel %vm174, %v148, 0
  %v185 = vsel %vm174, %v149, 0
  %187 = vmatprep.subr.mxu0 0.0
  %188 = vmatpush1.msra.mxu0 0.0
  %189 = vmatprep.subr.mxu0 0.0
  %190 = vmatpush1.msra.mxu0 0.0
  %191 = vmatprep.subr.mxu0 0.0
  %192 = vmatpush1.msra.mxu0 0.0
  %193 = vmatprep.subr.mxu0 0.0
  %194 = vmatpush1.msra.mxu0 0.0
  %195 = vmatprep.subr.mxu0 0.0
  %196 = vmatpush1.msra.mxu0 0.0
  %197 = vmatprep.subr.mxu0 0.0
  %198 = vmatpush1.msra.mxu0 0.0
  %199 = vmatprep.subr.mxu0 0.0
  %200 = vmatpush1.msra.mxu0 0.0
  %201 = vmatprep.subr.mxu0 0.0
  %202 = vmatpush1.msra.mxu0 0.0
  %203 = vmatprep.subr.mxu0 0.0
  %204 = vmatpush1.msra.mxu0 0.0
  %205 = vmatprep.subr.mxu0 0.0
  %206 = vmatpush1.msra.mxu0 0.0
  %207 = vmatprep.subr.mxu0 0.0
  %208 = vmatpush1.msra.mxu0 0.0
  %209 = vmatprep.subr.mxu0 0.0
  %210 = vmatpush1.msra.mxu0 0.0
  %211 = vmatprep.subr.mxu0 %v143
  %212 = vmatpush1.msra.mxu0 %v142
  %213 = vmatprep.subr.mxu0 %v139
  %214 = vmatpush1.msra.mxu0 %v138
  %215 = vmatprep.subr.mxu0 %v135
  %216 = vmatpush1.msra.mxu0 %v134
  %217 = vmatprep.subr.mxu0 %v131
  %218 = vmatpush1.msra.mxu0 %v130
  %219 = vmatprep.subr.mxu0 0.0
  %220 = vmatpush2.msra.mxu0 0.0
  %221 = vmatprep.subr.mxu0 0.0
  %222 = vmatpush2.msra.mxu0 0.0
  %223 = vmatprep.subr.mxu0 0.0
  %224 = vmatpush2.msra.mxu0 0.0
  %225 = vmatprep.subr.mxu0 0.0
  %226 = vmatpush2.msra.mxu0 0.0
  %227 = vmatprep.subr.mxu0 0.0
  %228 = vmatpush2.msra.mxu0 0.0
  %229 = vmatprep.subr.mxu0 0.0
  %230 = vmatpush2.msra.mxu0 0.0
  %231 = vmatprep.subr.mxu0 0.0
  %232 = vmatpush2.msra.mxu0 0.0
  %233 = vmatprep.subr.mxu0 0.0
  %234 = vmatpush2.msra.mxu0 0.0
  %235 = vmatprep.subr.mxu0 0.0
  %236 = vmatpush2.msra.mxu0 0.0
  %237 = vmatprep.subr.mxu0 0.0
  %238 = vmatpush2.msra.mxu0 0.0
  %239 = vmatprep.subr.mxu0 0.0
  %240 = vmatpush2.msra.mxu0 0.0
  %241 = vmatprep.subr.mxu0 0.0
  %242 = vmatpush2.msra.mxu0 0.0
  %243 = vmatprep.subr.mxu0 0.0
  %244 = vmatpush2.msra.mxu0 0.0
  %245 = vmatprep.subr.mxu0 0.0
  %246 = vmatpush2.msra.mxu0 0.0
  %247 = vmatprep.subr.mxu0 0.0
  %248 = vmatpush2.msra.mxu0 0.0
  %249 = vmatprep.subr.mxu0 0.0
  %250 = vmatpush2.msra.mxu0 0.0
  %251 = vmatprep.mubr.f32.mxu0 0.0
  %252 = vmatmul.mubr.f32.gmra.mxu0 %v176
  %v253 = vpop.f32.mrf.mxu0
  %v254 = vadd.f32 %v157, %v253
  %v255 = vpop.f32.mrf.mxu0
  %v256 = vadd.f32 %v157, %v255
  %257 = vmatprep.mubr.f32.mxu0 0.0
  %258 = vmatmul.mubr.f32.gmra.mxu0 %v179
  %v259 = vpop.f32.mrf.mxu0
  %v260 = vadd.f32 %v162, %v259
  %v261 = vpop.f32.mrf.mxu0
  %v262 = vadd.f32 %v162, %v261
  %263 = vmatprep.mubr.f32.mxu0 0.0
  %264 = vmatmul.mubr.f32.gmra.mxu0 %v182
  %v265 = vpop.f32.mrf.mxu0
  %v266 = vadd.f32 %v167, %v265
  %v267 = vpop.f32.mrf.mxu0
  %v268 = vadd.f32 %v167, %v267
  %269 = vmatprep.mubr.f32.mxu0 0.0
  %270 = vmatmul.mubr.f32.gmra.mxu0 %v185
  %v271 = vpop.f32.mrf.mxu0
  %v272 = vadd.f32 %v172, %v271
  %v273 = vpop.f32.mrf.mxu0
  %v274 = vadd.f32 %v172, %v273
  %275 = vdwg.mxu0
  %276 = vmatprep.subr.mxu0 0.0
  %277 = vmatpush1.msra.mxu0 0.0
  %278 = vmatprep.subr.mxu0 0.0
  %279 = vmatpush1.msra.mxu0 0.0
  %280 = vmatprep.subr.mxu0 0.0
  %281 = vmatpush1.msra.mxu0 0.0
  %282 = vmatprep.subr.mxu0 0.0
  %283 = vmatpush1.msra.mxu0 0.0
  %284 = vmatprep.subr.mxu0 0.0
  %285 = vmatpush1.msra.mxu0 0.0
  %286 = vmatprep.subr.mxu0 0.0
  %287 = vmatpush1.msra.mxu0 0.0
  %288 = vmatprep.subr.mxu0 0.0
  %289 = vmatpush1.msra.mxu0 0.0
  %290 = vmatprep.subr.mxu0 0.0
  %291 = vmatpush1.msra.mxu0 0.0
  %292 = vmatprep.subr.mxu0 0.0
  %293 = vmatpush1.msra.mxu0 0.0
  %294 = vmatprep.subr.mxu0 0.0
  %295 = vmatpush1.msra.mxu0 0.0
  %296 = vmatprep.subr.mxu0 0.0
  %297 = vmatpush1.msra.mxu0 0.0
  %298 = vmatprep.subr.mxu0 0.0
  %299 = vmatpush1.msra.mxu0 0.0
  %300 = vmatprep.subr.mxu0 %v145
  %301 = vmatpush1.msra.mxu0 %v144
  %302 = vmatprep.subr.mxu0 %v141
  %303 = vmatpush1.msra.mxu0 %v140
  %304 = vmatprep.subr.mxu0 %v137
  %305 = vmatpush1.msra.mxu0 %v136
  %306 = vmatprep.subr.mxu0 %v133
  %307 = vmatpush1.msra.mxu0 %v132
  %308 = vmatprep.subr.mxu0 0.0
  %309 = vmatpush2.msra.mxu0 0.0
  %310 = vmatprep.subr.mxu0 0.0
  %311 = vmatpush2.msra.mxu0 0.0
  %312 = vmatprep.subr.mxu0 0.0
  %313 = vmatpush2.msra.mxu0 0.0
  %314 = vmatprep.subr.mxu0 0.0
  %315 = vmatpush2.msra.mxu0 0.0
  %316 = vmatprep.subr.mxu0 0.0
  %317 = vmatpush2.msra.mxu0 0.0
  %318 = vmatprep.subr.mxu0 0.0
  %319 = vmatpush2.msra.mxu0 0.0
  %320 = vmatprep.subr.mxu0 0.0
  %321 = vmatpush2.msra.mxu0 0.0
  %322 = vmatprep.subr.mxu0 0.0
  %323 = vmatpush2.msra.mxu0 0.0
  %324 = vmatprep.subr.mxu0 0.0
  %325 = vmatpush2.msra.mxu0 0.0
  %326 = vmatprep.subr.mxu0 0.0
  %327 = vmatpush2.msra.mxu0 0.0
  %328 = vmatprep.subr.mxu0 0.0
  %329 = vmatpush2.msra.mxu0 0.0
  %330 = vmatprep.subr.mxu0 0.0
  %331 = vmatpush2.msra.mxu0 0.0
  %332 = vmatprep.subr.mxu0 0.0
  %333 = vmatpush2.msra.mxu0 0.0
  %334 = vmatprep.subr.mxu0 0.0
  %335 = vmatpush2.msra.mxu0 0.0
  %336 = vmatprep.subr.mxu0 0.0
  %337 = vmatpush2.msra.mxu0 0.0
  %338 = vmatprep.subr.mxu0 0.0
  %339 = vmatpush2.msra.mxu0 0.0
  %340 = vmatprep.mubr.f32.mxu0 0.0
  %341 = vmatmul.mubr.f32.gmra.mxu0 %v176
  %v342 = vpop.f32.mrf.mxu0
  %v343 = vadd.f32 %v157, %v342
  %v344 = vpop.f32.mrf.mxu0
  %v345 = vadd.f32 %v157, %v344
  %346 = vmatprep.mubr.f32.mxu0 0.0
  %347 = vmatmul.mubr.f32.gmra.mxu0 %v179
  %v348 = vpop.f32.mrf.mxu0
  %v349 = vadd.f32 %v162, %v348
  %v350 = vpop.f32.mrf.mxu0
  %v351 = vadd.f32 %v162, %v350
  %352 = vmatprep.mubr.f32.mxu0 0.0
  %353 = vmatmul.mubr.f32.gmra.mxu0 %v182
  %v354 = vpop.f32.mrf.mxu0
  %v355 = vadd.f32 %v167, %v354
  %v356 = vpop.f32.mrf.mxu0
  %v357 = vadd.f32 %v167, %v356
  %358 = vmatprep.mubr.f32.mxu0 0.0
  %359 = vmatmul.mubr.f32.gmra.mxu0 %v185
  %v360 = vpop.f32.mrf.mxu0
  %v361 = vadd.f32 %v172, %v360
  %v362 = vpop.f32.mrf.mxu0
  %v363 = vadd.f32 %v172, %v362
  %364 = vdwg.mxu0
  %v365 = vtanh.pop %v254
  %v366 = vtanh.pop %v256
  %v367 = vtanh.pop %v343
  %v368 = vtanh.pop %v345
  %v369 = vtanh.pop %v260
  %v370 = vtanh.pop %v262
  %v371 = vtanh.pop %v349
  %v372 = vtanh.pop %v351
  %v373 = vtanh.pop %v266
  %v374 = vtanh.pop %v268
  %v375 = vtanh.pop %v355
  %v376 = vtanh.pop %v357
  %v377 = vtanh.pop %v272
  %v378 = vtanh.pop %v274
  %v379 = vtanh.pop %v361
  %v380 = vtanh.pop %v363
  %s381 = scalar_lea.vmem %s3, 32
  %v382 = vld [vmem:[%s381] sm:$0xff]
  %v383 = vld [vmem:[%s381 + $0x8] sm:$0xff]
  %v384 = vld [vmem:[%s381 + $0x10] sm:$0xff]
  %v385 = vld [vmem:[%s381 + $0x18] sm:$0xff]
  %s386 = scalar_lea.vmem %s4, 32
  %v387 = vld [vmem:[%s386] sm:$0xff]
  %v388 = vld [vmem:[%s386 + $0x8] sm:$0xff]
  %v389 = vld [vmem:[%s386 + $0x10] sm:$0xff]
  %v390 = vld [vmem:[%s386 + $0x18] sm:$0xff]
  %392 = vset.pattern.permute.xlu0 0
  %393 = vperm.xlu0 %392, %v387
  %v394 = vpop.permute.xlu0 %393
  %397 = vset.pattern.permute.xlu0 0
  %398 = vperm.xlu0 %397, %v388
  %v399 = vpop.permute.xlu0 %398
  %402 = vset.pattern.permute.xlu0 0
  %403 = vperm.xlu0 %402, %v389
  %v404 = vpop.permute.xlu0 %403
  %407 = vset.pattern.permute.xlu0 0
  %408 = vperm.xlu0 %407, %v390
  %v409 = vpop.permute.xlu0 %408
  %v412 = vsel %vm174, %v382, 0
  %v415 = vsel %vm174, %v383, 0
  %v418 = vsel %vm174, %v384, 0
  %v421 = vsel %vm174, %v385, 0
  %423 = vmatprep.subr.mxu0 0.0
  %424 = vmatpush1.msra.mxu0 0.0
  %425 = vmatprep.subr.mxu0 0.0
  %426 = vmatpush1.msra.mxu0 0.0
  %427 = vmatprep.subr.mxu0 0.0
  %428 = vmatpush1.msra.mxu0 0.0
  %429 = vmatprep.subr.mxu0 0.0
  %430 = vmatpush1.msra.mxu0 0.0
  %431 = vmatprep.subr.mxu0 0.0
  %432 = vmatpush1.msra.mxu0 0.0
  %433 = vmatprep.subr.mxu0 0.0
  %434 = vmatpush1.msra.mxu0 0.0
  %435 = vmatprep.subr.mxu0 0.0
  %436 = vmatpush1.msra.mxu0 0.0
  %437 = vmatprep.subr.mxu0 0.0
  %438 = vmatpush1.msra.mxu0 0.0
  %439 = vmatprep.subr.mxu0 0.0
  %440 = vmatpush1.msra.mxu0 0.0
  %441 = vmatprep.subr.mxu0 0.0
  %442 = vmatpush1.msra.mxu0 0.0
  %443 = vmatprep.subr.mxu0 0.0
  %444 = vmatpush1.msra.mxu0 0.0
  %445 = vmatprep.subr.mxu0 0.0
  %446 = vmatpush1.msra.mxu0 0.0
  %447 = vmatprep.subr.mxu0 %v378
  %448 = vmatpush1.msra.mxu0 %v377
  %449 = vmatprep.subr.mxu0 %v374
  %450 = vmatpush1.msra.mxu0 %v373
  %451 = vmatprep.subr.mxu0 %v370
  %452 = vmatpush1.msra.mxu0 %v369
  %453 = vmatprep.subr.mxu0 %v366
  %454 = vmatpush1.msra.mxu0 %v365
  %455 = vmatprep.subr.mxu0 0.0
  %456 = vmatpush2.msra.mxu0 0.0
  %457 = vmatprep.subr.mxu0 0.0
  %458 = vmatpush2.msra.mxu0 0.0
  %459 = vmatprep.subr.mxu0 0.0
  %460 = vmatpush2.msra.mxu0 0.0
  %461 = vmatprep.subr.mxu0 0.0
  %462 = vmatpush2.msra.mxu0 0.0
  %463 = vmatprep.subr.mxu0 0.0
  %464 = vmatpush2.msra.mxu0 0.0
  %465 = vmatprep.subr.mxu0 0.0
  %466 = vmatpush2.msra.mxu0 0.0
  %467 = vmatprep.subr.mxu0 0.0
  %468 = vmatpush2.msra.mxu0 0.0
  %469 = vmatprep.subr.mxu0 0.0
  %470 = vmatpush2.msra.mxu0 0.0
  %471 = vmatprep.subr.mxu0 0.0
  %472 = vmatpush2.msra.mxu0 0.0
  %473 = vmatprep.subr.mxu0 0.0
  %474 = vmatpush2.msra.mxu0 0.0
  %475 = vmatprep.subr.mxu0 0.0
  %476 = vmatpush2.msra.mxu0 0.0
  %477 = vmatprep.subr.mxu0 0.0
  %478 = vmatpush2.msra.mxu0 0.0
  %479 = vmatprep.subr.mxu0 0.0
  %480 = vmatpush2.msra.mxu0 0.0
  %481 = vmatprep.subr.mxu0 0.0
  %482 = vmatpush2.msra.mxu0 0.0
  %483 = vmatprep.subr.mxu0 0.0
  %484 = vmatpush2.msra.mxu0 0.0
  %485 = vmatprep.subr.mxu0 0.0
  %486 = vmatpush2.msra.mxu0 0.0
  %487 = vmatprep.mubr.f32.mxu0 0.0
  %488 = vmatmul.mubr.f32.gmra.mxu0 %v412
  %v489 = vpop.f32.mrf.mxu0
  %v490 = vadd.f32 %v394, %v489
  %v491 = vpop.f32.mrf.mxu0
  %v492 = vadd.f32 %v394, %v491
  %493 = vmatprep.mubr.f32.mxu0 0.0
  %494 = vmatmul.mubr.f32.gmra.mxu0 %v415
  %v495 = vpop.f32.mrf.mxu0
  %v496 = vadd.f32 %v399, %v495
  %v497 = vpop.f32.mrf.mxu0
  %v498 = vadd.f32 %v399, %v497
  %499 = vmatprep.mubr.f32.mxu0 0.0
  %500 = vmatmul.mubr.f32.gmra.mxu0 %v418
  %v501 = vpop.f32.mrf.mxu0
  %v502 = vadd.f32 %v404, %v501
  %v503 = vpop.f32.mrf.mxu0
  %v504 = vadd.f32 %v404, %v503
  %505 = vmatprep.mubr.f32.mxu0 0.0
  %506 = vmatmul.mubr.f32.gmra.mxu0 %v421
  %v507 = vpop.f32.mrf.mxu0
  %v508 = vadd.f32 %v409, %v507
  %v509 = vpop.f32.mrf.mxu0
  %v510 = vadd.f32 %v409, %v509
  %511 = vdwg.mxu0
  %512 = vmatprep.subr.mxu0 0.0
  %513 = vmatpush1.msra.mxu0 0.0
  %514 = vmatprep.subr.mxu0 0.0
  %515 = vmatpush1.msra.mxu0 0.0
  %516 = vmatprep.subr.mxu0 0.0
  %517 = vmatpush1.msra.mxu0 0.0
  %518 = vmatprep.subr.mxu0 0.0
  %519 = vmatpush1.msra.mxu0 0.0
  %520 = vmatprep.subr.mxu0 0.0
  %521 = vmatpush1.msra.mxu0 0.0
  %522 = vmatprep.subr.mxu0 0.0
  %523 = vmatpush1.msra.mxu0 0.0
  %524 = vmatprep.subr.mxu0 0.0
  %525 = vmatpush1.msra.mxu0 0.0
  %526 = vmatprep.subr.mxu0 0.0
  %527 = vmatpush1.msra.mxu0 0.0
  %528 = vmatprep.subr.mxu0 0.0
  %529 = vmatpush1.msra.mxu0 0.0
  %530 = vmatprep.subr.mxu0 0.0
  %531 = vmatpush1.msra.mxu0 0.0
  %532 = vmatprep.subr.mxu0 0.0
  %533 = vmatpush1.msra.mxu0 0.0
  %534 = vmatprep.subr.mxu0 0.0
  %535 = vmatpush1.msra.mxu0 0.0
  %536 = vmatprep.subr.mxu0 %v380
  %537 = vmatpush1.msra.mxu0 %v379
  %538 = vmatprep.subr.mxu0 %v376
  %539 = vmatpush1.msra.mxu0 %v375
  %540 = vmatprep.subr.mxu0 %v372
  %541 = vmatpush1.msra.mxu0 %v371
  %542 = vmatprep.subr.mxu0 %v368
  %543 = vmatpush1.msra.mxu0 %v367
  %544 = vmatprep.subr.mxu0 0.0
  %545 = vmatpush2.msra.mxu0 0.0
  %546 = vmatprep.subr.mxu0 0.0
  %547 = vmatpush2.msra.mxu0 0.0
  %548 = vmatprep.subr.mxu0 0.0
  %549 = vmatpush2.msra.mxu0 0.0
  %550 = vmatprep.subr.mxu0 0.0
  %551 = vmatpush2.msra.mxu0 0.0
  %552 = vmatprep.subr.mxu0 0.0
  %553 = vmatpush2.msra.mxu0 0.0
  %554 = vmatprep.subr.mxu0 0.0
  %555 = vmatpush2.msra.mxu0 0.0
  %556 = vmatprep.subr.mxu0 0.0
  %557 = vmatpush2.msra.mxu0 0.0
  %558 = vmatprep.subr.mxu0 0.0
  %559 = vmatpush2.msra.mxu0 0.0
  %560 = vmatprep.subr.mxu0 0.0
  %561 = vmatpush2.msra.mxu0 0.0
  %562 = vmatprep.subr.mxu0 0.0
  %563 = vmatpush2.msra.mxu0 0.0
  %564 = vmatprep.subr.mxu0 0.0
  %565 = vmatpush2.msra.mxu0 0.0
  %566 = vmatprep.subr.mxu0 0.0
  %567 = vmatpush2.msra.mxu0 0.0
  %568 = vmatprep.subr.mxu0 0.0
  %569 = vmatpush2.msra.mxu0 0.0
  %570 = vmatprep.subr.mxu0 0.0
  %571 = vmatpush2.msra.mxu0 0.0
  %572 = vmatprep.subr.mxu0 0.0
  %573 = vmatpush2.msra.mxu0 0.0
  %574 = vmatprep.subr.mxu0 0.0
  %575 = vmatpush2.msra.mxu0 0.0
  %576 = vmatprep.mubr.f32.mxu0 0.0
  %577 = vmatmul.mubr.f32.gmra.mxu0 %v412
  %v578 = vpop.f32.mrf.mxu0
  %v579 = vadd.f32 %v394, %v578
  %v580 = vpop.f32.mrf.mxu0
  %v581 = vadd.f32 %v394, %v580
  %582 = vmatprep.mubr.f32.mxu0 0.0
  %583 = vmatmul.mubr.f32.gmra.mxu0 %v415
  %v584 = vpop.f32.mrf.mxu0
  %v585 = vadd.f32 %v399, %v584
  %v586 = vpop.f32.mrf.mxu0
  %v587 = vadd.f32 %v399, %v586
  %588 = vmatprep.mubr.f32.mxu0 0.0
  %589 = vmatmul.mubr.f32.gmra.mxu0 %v418
  %v590 = vpop.f32.mrf.mxu0
  %v591 = vadd.f32 %v404, %v590
  %v592 = vpop.f32.mrf.mxu0
  %v593 = vadd.f32 %v404, %v592
  %594 = vmatprep.mubr.f32.mxu0 0.0
  %595 = vmatmul.mubr.f32.gmra.mxu0 %v421
  %v596 = vpop.f32.mrf.mxu0
  %v597 = vadd.f32 %v409, %v596
  %v598 = vpop.f32.mrf.mxu0
  %v599 = vadd.f32 %v409, %v598
  %600 = vdwg.mxu0
  %v601 = vtanh.pop %v490
  %v602 = vtanh.pop %v492
  %v603 = vtanh.pop %v579
  %v604 = vtanh.pop %v581
  %v605 = vtanh.pop %v496
  %v606 = vtanh.pop %v498
  %v607 = vtanh.pop %v585
  %v608 = vtanh.pop %v587
  %v609 = vtanh.pop %v502
  %v610 = vtanh.pop %v504
  %v611 = vtanh.pop %v591
  %v612 = vtanh.pop %v593
  %v613 = vtanh.pop %v508
  %v614 = vtanh.pop %v510
  %v615 = vtanh.pop %v597
  %v616 = vtanh.pop %v599
  %v617 = vld [vmem:[%s5] sm:$0x1]
  %v618 = vld [vmem:[#allocation2] sm:$0x1]
  %620 = vset.pattern.permute.xlu0 0
  %621 = vperm.xlu0 %620, %v618
  %v622 = vpop.permute.xlu0 %621
  %v624 = vlaneseq
  %v625 = vshrl.u32 %v624, 7
  %v626 = vsub.s32 0, %v625
  %v627 = vrot.slane %v622, %v626
  %v629 = vsel %vm174, %v617, 0
  %631 = vmatprep.subr.mxu0 0.0
  %632 = vmatpush1.msra.mxu0 0.0
  %633 = vmatprep.subr.mxu0 0.0
  %634 = vmatpush1.msra.mxu0 0.0
  %635 = vmatprep.subr.mxu0 0.0
  %636 = vmatpush1.msra.mxu0 0.0
  %637 = vmatprep.subr.mxu0 0.0
  %638 = vmatpush1.msra.mxu0 0.0
  %639 = vmatprep.subr.mxu0 0.0
  %640 = vmatpush1.msra.mxu0 0.0
  %641 = vmatprep.subr.mxu0 0.0
  %642 = vmatpush1.msra.mxu0 0.0
  %643 = vmatprep.subr.mxu0 0.0
  %644 = vmatpush1.msra.mxu0 0.0
  %645 = vmatprep.subr.mxu0 0.0
  %646 = vmatpush1.msra.mxu0 0.0
  %647 = vmatprep.subr.mxu0 0.0
  %648 = vmatpush1.msra.mxu0 0.0
  %649 = vmatprep.subr.mxu0 0.0
  %650 = vmatpush1.msra.mxu0 0.0
  %651 = vmatprep.subr.mxu0 0.0
  %652 = vmatpush1.msra.mxu0 0.0
  %653 = vmatprep.subr.mxu0 0.0
  %654 = vmatpush1.msra.mxu0 0.0
  %655 = vmatprep.subr.mxu0 %v614
  %656 = vmatpush1.msra.mxu0 %v613
  %657 = vmatprep.subr.mxu0 %v610
  %658 = vmatpush1.msra.mxu0 %v609
  %659 = vmatprep.subr.mxu0 %v606
  %660 = vmatpush1.msra.mxu0 %v605
  %661 = vmatprep.subr.mxu0 %v602
  %662 = vmatpush1.msra.mxu0 %v601
  %663 = vmatprep.subr.mxu0 0.0
  %664 = vmatpush2.msra.mxu0 0.0
  %665 = vmatprep.subr.mxu0 0.0
  %666 = vmatpush2.msra.mxu0 0.0
  %667 = vmatprep.subr.mxu0 0.0
  %668 = vmatpush2.msra.mxu0 0.0
  %669 = vmatprep.subr.mxu0 0.0
  %670 = vmatpush2.msra.mxu0 0.0
  %671 = vmatprep.subr.mxu0 0.0
  %672 = vmatpush2.msra.mxu0 0.0
  %673 = vmatprep.subr.mxu0 0.0
  %674 = vmatpush2.msra.mxu0 0.0
  %675 = vmatprep.subr.mxu0 0.0
  %676 = vmatpush2.msra.mxu0 0.0
  %677 = vmatprep.subr.mxu0 0.0
  %678 = vmatpush2.msra.mxu0 0.0
  %679 = vmatprep.subr.mxu0 0.0
  %680 = vmatpush2.msra.mxu0 0.0
  %681 = vmatprep.subr.mxu0 0.0
  %682 = vmatpush2.msra.mxu0 0.0
  %683 = vmatprep.subr.mxu0 0.0
  %684 = vmatpush2.msra.mxu0 0.0
  %685 = vmatprep.subr.mxu0 0.0
  %686 = vmatpush2.msra.mxu0 0.0
  %687 = vmatprep.subr.mxu0 0.0
  %688 = vmatpush2.msra.mxu0 0.0
  %689 = vmatprep.subr.mxu0 0.0
  %690 = vmatpush2.msra.mxu0 0.0
  %691 = vmatprep.subr.mxu0 0.0
  %692 = vmatpush2.msra.mxu0 0.0
  %693 = vmatprep.subr.mxu0 0.0
  %694 = vmatpush2.msra.mxu0 0.0
  %695 = vmatprep.mubr.f32.mxu0 0.0
  %696 = vmatmul.mubr.f32.gmra.mxu0 %v629
  %v697 = vpop.f32.mrf.mxu0
  %v698 = vadd.f32 %v627, %v697
  %v699 = vpop.f32.mrf.mxu0
  %v700 = vadd.f32 %v627, %v699
  %701 = vdwg.mxu0
  %702 = vmatprep.subr.mxu0 0.0
  %703 = vmatpush1.msra.mxu0 0.0
  %704 = vmatprep.subr.mxu0 0.0
  %705 = vmatpush1.msra.mxu0 0.0
  %706 = vmatprep.subr.mxu0 0.0
  %707 = vmatpush1.msra.mxu0 0.0
  %708 = vmatprep.subr.mxu0 0.0
  %709 = vmatpush1.msra.mxu0 0.0
  %710 = vmatprep.subr.mxu0 0.0
  %711 = vmatpush1.msra.mxu0 0.0
  %712 = vmatprep.subr.mxu0 0.0
  %713 = vmatpush1.msra.mxu0 0.0
  %714 = vmatprep.subr.mxu0 0.0
  %715 = vmatpush1.msra.mxu0 0.0
  %716 = vmatprep.subr.mxu0 0.0
  %717 = vmatpush1.msra.mxu0 0.0
  %718 = vmatprep.subr.mxu0 0.0
  %719 = vmatpush1.msra.mxu0 0.0
  %720 = vmatprep.subr.mxu0 0.0
  %721 = vmatpush1.msra.mxu0 0.0
  %722 = vmatprep.subr.mxu0 0.0
  %723 = vmatpush1.msra.mxu0 0.0
  %724 = vmatprep.subr.mxu0 0.0
  %725 = vmatpush1.msra.mxu0 0.0
  %726 = vmatprep.subr.mxu0 %v616
  %727 = vmatpush1.msra.mxu0 %v615
  %728 = vmatprep.subr.mxu0 %v612
  %729 = vmatpush1.msra.mxu0 %v611
  %730 = vmatprep.subr.mxu0 %v608
  %731 = vmatpush1.msra.mxu0 %v607
  %732 = vmatprep.subr.mxu0 %v604
  %733 = vmatpush1.msra.mxu0 %v603
  %734 = vmatprep.subr.mxu0 0.0
  %735 = vmatpush2.msra.mxu0 0.0
  %736 = vmatprep.subr.mxu0 0.0
  %737 = vmatpush2.msra.mxu0 0.0
  %738 = vmatprep.subr.mxu0 0.0
  %739 = vmatpush2.msra.mxu0 0.0
  %740 = vmatprep.subr.mxu0 0.0
  %741 = vmatpush2.msra.mxu0 0.0
  %742 = vmatprep.subr.mxu0 0.0
  %743 = vmatpush2.msra.mxu0 0.0
  %744 = vmatprep.subr.mxu0 0.0
  %745 = vmatpush2.msra.mxu0 0.0
  %746 = vmatprep.subr.mxu0 0.0
  %747 = vmatpush2.msra.mxu0 0.0
  %748 = vmatprep.subr.mxu0 0.0
  %749 = vmatpush2.msra.mxu0 0.0
  %750 = vmatprep.subr.mxu0 0.0
  %751 = vmatpush2.msra.mxu0 0.0
  %752 = vmatprep.subr.mxu0 0.0
  %753 = vmatpush2.msra.mxu0 0.0
  %754 = vmatprep.subr.mxu0 0.0
  %755 = vmatpush2.msra.mxu0 0.0
  %756 = vmatprep.subr.mxu0 0.0
  %757 = vmatpush2.msra.mxu0 0.0
  %758 = vmatprep.subr.mxu0 0.0
  %759 = vmatpush2.msra.mxu0 0.0
  %760 = vmatprep.subr.mxu0 0.0
  %761 = vmatpush2.msra.mxu0 0.0
  %762 = vmatprep.subr.mxu0 0.0
  %763 = vmatpush2.msra.mxu0 0.0
  %764 = vmatprep.subr.mxu0 0.0
  %765 = vmatpush2.msra.mxu0 0.0
  %766 = vmatprep.mubr.f32.mxu0 0.0
  %767 = vmatmul.mubr.f32.gmra.mxu0 %v629
  %v768 = vpop.f32.mrf.mxu0
  %v769 = vadd.f32 %v627, %v768
  %v770 = vpop.f32.mrf.mxu0
  %v771 = vadd.f32 %v627, %v770
  %772 = vdwg.mxu0
  %v777 = vcombine.low %v698, %v700
  %v778 = vcombine.low %v769, %v771
  %v780 = vunpack.c.l.s4 1966171168
  %v781 = vunpack.c.0.s8 %v780
  %v782 = vlaneseq
  %v783 = vshrl.u32 %v782, 7
  %v784 = vsub.s32 %v781, %v783
  %v785 = vrot.slane %v777, %v784
  %v787 = vunpack.c.l.s4 1966171168
  %v788 = vunpack.c.0.s8 %v787
  %v789 = vlaneseq
  %v790 = vshrl.u32 %v789, 7
  %v791 = vsub.s32 %v788, %v790
  %v792 = vrot.slane %v778, %v791
  %v793 = vcombine.low %v785, %v792
  %v795 = vunpack.c.l.s4 1966171168
  %v796 = vunpack.c.0.s8 %v795
  %v797 = vlaneseq
  %v798 = vshrl.u32 %v797, 7
  %v799 = vsub.s32 %v796, %v798
  %v800 = vrot.slane %v793, %v799
  %v802 = vlaneseq
  %vm803 = vcmp.ge.s32.totalorder %v802, 0
  %vm804 = vcmp.lt.s32.totalorder %v802, 512
  %vm805 = vmand %vm803, %vm804
  %806 = vst.msk [vmem:[%s7] sm:$0xf] %vm805, %v800
  // Predicated region
  $region30: #{fcn_forward.1} parent=0 // pred_check
    _
  $region31: #{fcn_forward.1} parent=0 // pred_check_branch
    %808 = sbr.rel (0) target = $region33
  $region32: #{fcn_forward.1} parent=0 // pred_region
    _
  $region33: #{fcn_forward.1} parent=0 // pred_fallthru
    _
  // Predicated region
  $region34: #{fcn_forward.1} parent=0 // pred_check
    _
  $region35: #{fcn_forward.1} parent=0 // pred_check_branch
    %810 = sbr.rel (0) target = $region37
  $region36: #{fcn_forward.1} parent=0 // pred_region
    _
  $region37: #{fcn_forward.1} parent=0 // pred_fallthru
    _

</llo_original>
